<compile_context>
chip_gen: v7x
topology: tpu7x:2x2x1
jax: 0.10.0
libtpu: 0.0.40
codegen_flags: <defaults>
</compile_context>

<pallas_src>
import functools

import jax
import jax.numpy as jnp
from jax.experimental import pallas as pl
from jax.experimental.pallas import tpu as pltpu

NUM_L1 = 400          # true fc1 / LayerNorm width
NUM_L2 = 300          # true fc2 / LayerNorm width
L1P = 512             # 400 padded to a 128-multiple
L2P = 384             # 300 padded to a 128-multiple
LN_EPS = 1e-5         # torch.nn.LayerNorm default


def _round_up(x, m):
    return (x + m - 1) // m * m


def _layernorm_masked(x, gamma, beta, true_n):
    """LayerNorm over the first `true_n` lanes of x; padded lanes of x are zero
    on entry and stay exactly zero on exit (gamma/beta are zero-padded)."""
    mask = jax.lax.broadcasted_iota(jnp.int32, x.shape, 1) < true_n
    inv_n = 1.0 / float(true_n)
    mu = jnp.sum(x, axis=-1, keepdims=True) * inv_n
    centered = jnp.where(mask, x - mu, 0.0)
    var = jnp.sum(centered * centered, axis=-1, keepdims=True) * inv_n
    return centered * jax.lax.rsqrt(var + LN_EPS) * gamma + beta


def critic_kernel(state_ref, action_ref, w1_ref, w2_ref, vec1_ref, vec2_ref,
                  out_ref, *, num_actions):
    state = state_ref[...]           # [TB, Ds]  f32
    action = action_ref[...]         # [TB, A]   f32

    b1, g1, be1 = vec1_ref[0:1, :], vec1_ref[1:2, :], vec1_ref[2:3, :]

    # fc1 (bf16 MXU, f32 accumulation) -> masked LayerNorm(400) -> relu
    h = jnp.dot(state.astype(jnp.bfloat16), w1_ref[...],
                preferred_element_type=jnp.float32) + b1
    h = _layernorm_masked(h, g1, be1, NUM_L1)
    h = jnp.maximum(h, 0.0)

    b2, g2, be2 = vec2_ref[0:1, :], vec2_ref[1:2, :], vec2_ref[2:3, :]

    # fc2_val1 (bf16 MXU) -> masked LayerNorm(300)
    v1 = jnp.dot(h.astype(jnp.bfloat16), w2_ref[...],
                 preferred_element_type=jnp.float32) + b2
    v1 = _layernorm_masked(v1, g2, be2, NUM_L2)

    # fc2_val2(action): K = num_actions is tiny -> unrolled VPU multiply-adds,
    # no degenerate MXU pass.
    v2 = vec2_ref[3:4, :]                                   # b3  [1, L2P]
    for k in range(num_actions):                            # static unroll
        v2 = v2 + action[:, k:k + 1] * vec2_ref[4 + k:5 + k, :]

    s = jnp.maximum(v1 + v2, 0.0)                           # [TB, L2P]

    # qval: N = 1 -> VPU multiply + lane reduction instead of a 1-column matmul.
    # (Output stays [B, 1] to match the module's contract; masked stores on this
    #  tiny output are negligible.)
    wq = vec2_ref[4 + num_actions:5 + num_actions, :]       # [1, L2P]
    bq = vec2_ref[5 + num_actions:6 + num_actions, 0:1]     # [1, 1]
    q = jnp.sum(s * wq, axis=-1, keepdims=True) + bq
    out_ref[...] = q


@functools.partial(jax.jit, static_argnames=("tb",))
def critic_forward(state, action, packed, tb=256):
    """state: [B, Ds] f32, action: [B, A] f32, packed: dict from pack_params."""
    B, Ds = state.shape
    A = action.shape[1]

    TB = min(_round_up(tb, 8), _round_up(B, 8))
    Bp = _round_up(B, TB)
    if Bp != B:
        state = jnp.pad(state, ((0, Bp - B), (0, 0)))
        action = jnp.pad(action, ((0, Bp - B), (0, 0)))

    grid = (Bp // TB,)
    kernel = functools.partial(critic_kernel, num_actions=A)

    out = pl.pallas_call(
        kernel,
        out_shape=jax.ShapeDtypeStruct((Bp, 1), jnp.float32),
        grid=grid,
        in_specs=[
            # batch-tiled activations
            pl.BlockSpec((TB, Ds), lambda i: (i, 0)),
            pl.BlockSpec((TB, A), lambda i: (i, 0)),
            # parameters: constant index_map -> resident in VMEM across steps
            pl.BlockSpec((Ds, L1P), lambda i: (0, 0)),
            pl.BlockSpec((L1P, L2P), lambda i: (0, 0)),
            pl.BlockSpec((3, L1P), lambda i: (0, 0)),
            pl.BlockSpec((6 + A, L2P), lambda i: (0, 0)),
        ],
        out_specs=pl.BlockSpec((TB, 1), lambda i: (i, 0)),
        compiler_params=pltpu.CompilerParams(
            dimension_semantics=("parallel",)),
    )(state, action, packed["w1"], packed["w2"], packed["vec1"], packed["vec2"])
    return out[:B]


def init_params(key, state_dim, num_actions):
    """Logical (unpadded, f32) params mirroring the PyTorch module's init."""
    ks = jax.random.split(key, 8)
    f1 = 1.0 / (NUM_L1 ** 0.5)       # 1/sqrt(fc1.weight.size()[0]) = 1/sqrt(400)
    f2 = 1.0 / (NUM_L2 ** 0.5)       # 1/sqrt(300)
    f3 = 0.003
    fa = 1.0 / (num_actions ** 0.5)  # default nn.Linear init scale

    def u(k, shape, lim):
        return jax.random.uniform(k, shape, jnp.float32, -lim, lim)

    return {
        "w1": u(ks[0], (state_dim, NUM_L1), f1),       # stored [in, out]
        "b1": u(ks[1], (1, NUM_L1), f2),               # module re-inits fc1.bias with f2
        "g1": jnp.ones((1, NUM_L1), jnp.float32),
        "be1": jnp.zeros((1, NUM_L1), jnp.float32),
        "w2": u(ks[2], (NUM_L1, NUM_L2), f2),
        "b2": u(ks[3], (1, NUM_L2), 1.0 / (NUM_L1 ** 0.5)),
        "g2": jnp.ones((1, NUM_L2), jnp.float32),
        "be2": jnp.zeros((1, NUM_L2), jnp.float32),
        "w3": u(ks[4], (num_actions, NUM_L2), fa),
        "b3": u(ks[5], (1, NUM_L2), fa),
        "wq": u(ks[6], (NUM_L2, 1), f3),
        "bq": u(ks[7], (1, 1), f3),
    }


def pack_params(p, num_actions):
    """Zero-pad to (512, 384), cast big matrices to bf16, pack small vectors."""
    Ds = p["w1"].shape[0]
    A = num_actions

    w1 = jnp.zeros((Ds, L1P), jnp.bfloat16).at[:, :NUM_L1].set(
        p["w1"].astype(jnp.bfloat16))
    w2 = jnp.zeros((L1P, L2P), jnp.bfloat16).at[:NUM_L1, :NUM_L2].set(
        p["w2"].astype(jnp.bfloat16))

    vec1 = jnp.zeros((3, L1P), jnp.float32)
    vec1 = (vec1.at[0, :NUM_L1].set(p["b1"][0])
                .at[1, :NUM_L1].set(p["g1"][0])
                .at[2, :NUM_L1].set(p["be1"][0]))

    vec2 = jnp.zeros((6 + A, L2P), jnp.float32)
    vec2 = (vec2.at[0, :NUM_L2].set(p["b2"][0])
                .at[1, :NUM_L2].set(p["g2"][0])
                .at[2, :NUM_L2].set(p["be2"][0])
                .at[3, :NUM_L2].set(p["b3"][0])
                .at[4:4 + A, :NUM_L2].set(p["w3"])
                .at[4 + A, :NUM_L2].set(p["wq"][:, 0])
                .at[5 + A, 0].set(p["bq"][0, 0]))

    return {"w1": w1, "w2": w2, "vec1": vec1, "vec2": vec2}


def _layernorm_ref(x, gamma, beta):
    mu = jnp.mean(x, axis=-1, keepdims=True)
    var = jnp.mean((x - mu) * (x - mu), axis=-1, keepdims=True)
    return (x - mu) * jax.lax.rsqrt(var + LN_EPS) * gamma + beta


def reference_forward(state, action, p):
    """Pure-JAX reference using the same bf16 matmul operands as the kernel."""
    h = jnp.dot(state.astype(jnp.bfloat16), p["w1"].astype(jnp.bfloat16),
                preferred_element_type=jnp.float32) + p["b1"]
    h = _layernorm_ref(h, p["g1"], p["be1"])
    h = jnp.maximum(h, 0.0)
    v1 = jnp.dot(h.astype(jnp.bfloat16), p["w2"].astype(jnp.bfloat16),
                 preferred_element_type=jnp.float32) + p["b2"]
    v1 = _layernorm_ref(v1, p["g2"], p["be2"])
    v2 = action @ p["w3"] + p["b3"]
    s = jnp.maximum(v1 + v2, 0.0)
    return s @ p["wq"] + p["bq"]


if __name__ == "__main__":
    B = 64           # batch (small, but enough for a 2-step grid with tb=32)
    STATE_DIM = 16   # input_dims
    NUM_ACTIONS = 4

    key = jax.random.PRNGKey(0)
    k_params, k_state, k_action = jax.random.split(key, 3)

    params = init_params(k_params, STATE_DIM, NUM_ACTIONS)
    packed = pack_params(params, NUM_ACTIONS)
    state = jax.random.normal(k_state, (B, STATE_DIM), jnp.float32)
    action = jax.random.normal(k_action, (B, NUM_ACTIONS), jnp.float32)

    q = critic_forward(state, action, packed, tb=32)
    jax.block_until_ready(q)

    q_ref = reference_forward(state, action, params)
    assert q.shape == (B, 1)
    assert jnp.allclose(q, q_ref, atol=1e-3, rtol=1e-3), (
        float(jnp.max(jnp.abs(q - q_ref))))

    print("KERNEL_OK")
</pallas_src>

<mosaic_0001>
module attributes {stable_mosaic.version = 11 : i64} {
  func.func @critic_kernel(%arg0: i32, %arg1: memref<32x16xf32, #tpu.memory_space<vmem>>, %arg2: memref<32x4xf32, #tpu.memory_space<vmem>>, %arg3: memref<16x512xbf16, #tpu.memory_space<vmem>>, %arg4: memref<512x384xbf16, #tpu.memory_space<vmem>>, %arg5: memref<3x512xf32, #tpu.memory_space<vmem>>, %arg6: memref<10x384xf32, #tpu.memory_space<vmem>>, %arg7: memref<32x1xf32, #tpu.memory_space<vmem>>) attributes {dimension_semantics = [#tpu.dimension_semantics<parallel>], iteration_bounds = array<i64: 2>, scalar_prefetch = 0 : i64, scratch_operands = 0 : i64, tpu.core_type = #tpu.core_type<tc>, window_params = [{transform_indices = @transform_0, window_bounds = array<i64: 32, 16>}, {transform_indices = @transform_1, window_bounds = array<i64: 32, 4>}, {pipeline_mode = #tpu.pipeline_mode<synchronous>, transform_indices = @transform_2, window_bounds = array<i64: 16, 512>}, {pipeline_mode = #tpu.pipeline_mode<synchronous>, transform_indices = @transform_3, window_bounds = array<i64: 512, 384>}, {pipeline_mode = #tpu.pipeline_mode<synchronous>, transform_indices = @transform_4, window_bounds = array<i64: 3, 512>}, {pipeline_mode = #tpu.pipeline_mode<synchronous>, transform_indices = @transform_5, window_bounds = array<i64: 10, 384>}, {transform_indices = @transform_6, window_bounds = array<i64: 32, 1>}]} {
    %c0 = arith.constant 0 : index
    %c0_0 = arith.constant 0 : index
    %0 = vector.load %arg1[%c0, %c0_0] : memref<32x16xf32, #tpu.memory_space<vmem>>, vector<32x16xf32>
    %c0_1 = arith.constant 0 : index
    %c0_2 = arith.constant 0 : index
    %1 = vector.load %arg2[%c0_1, %c0_2] : memref<32x4xf32, #tpu.memory_space<vmem>>, vector<32x4xf32>
    %c0_3 = arith.constant 0 : index
    %c0_4 = arith.constant 0 : index
    %2 = vector.load %arg5[%c0_3, %c0_4] : memref<3x512xf32, #tpu.memory_space<vmem>>, vector<1x512xf32>
    %c1 = arith.constant 1 : index
    %c0_5 = arith.constant 0 : index
    %3 = vector.load %arg5[%c1, %c0_5] : memref<3x512xf32, #tpu.memory_space<vmem>>, vector<1x512xf32>
    %c2 = arith.constant 2 : index
    %c0_6 = arith.constant 0 : index
    %4 = vector.load %arg5[%c2, %c0_6] : memref<3x512xf32, #tpu.memory_space<vmem>>, vector<1x512xf32>
    %5 = arith.truncf %0 : vector<32x16xf32> to vector<32x16xbf16>
    %c0_7 = arith.constant 0 : index
    %c0_8 = arith.constant 0 : index
    %6 = vector.load %arg3[%c0_7, %c0_8] : memref<16x512xbf16, #tpu.memory_space<vmem>>, vector<16x512xbf16>
    %cst = arith.constant dense<0.000000e+00> : vector<32x512xf32>
    %7 = tpu.matmul %5, %6, %cst {dimension_numbers = #tpu.dot_dimension_numbers<[1], [0], [0], [1], [0, 0, 1, 1], [], []>} : vector<32x16xbf16>, vector<16x512xbf16>, vector<32x512xf32> -> vector<32x512xf32>
    %8 = vector.broadcast %2 : vector<1x512xf32> to vector<32x512xf32>
    %9 = arith.addf %7, %8 : vector<32x512xf32>
    %10 = tpu.iota {dimensions = array<i32: 1>} : vector<32x512xi32>
    %c400_i32 = arith.constant 400 : i32
    %11 = vector.broadcast %c400_i32 : i32 to vector<32x512xi32>
    %12 = arith.cmpi slt, %10, %11 : vector<32x512xi32>
    %cst_9 = arith.constant dense<0.000000e+00> : vector<32xf32>
    %13 = vector.multi_reduction <add>, %9, %cst_9 [1] : vector<32x512xf32> to vector<32xf32>
    %14 = vector.shape_cast %13 : vector<32xf32> to vector<32x1xf32>
    %cst_10 = arith.constant 2.500000e-03 : f32
    %15 = vector.broadcast %cst_10 : f32 to vector<32x1xf32>
    %16 = arith.mulf %14, %15 : vector<32x1xf32>
    %17 = vector.broadcast %16 : vector<32x1xf32> to vector<32x512xf32>
    %18 = arith.subf %9, %17 : vector<32x512xf32>
    %cst_11 = arith.constant 0.000000e+00 : f32
    %19 = vector.broadcast %cst_11 : f32 to vector<32x512xf32>
    %20 = arith.select %12, %18, %19 : vector<32x512xi1>, vector<32x512xf32>
    %21 = arith.mulf %20, %20 : vector<32x512xf32>
    %cst_12 = arith.constant dense<0.000000e+00> : vector<32xf32>
    %22 = vector.multi_reduction <add>, %21, %cst_12 [1] : vector<32x512xf32> to vector<32xf32>
    %23 = vector.shape_cast %22 : vector<32xf32> to vector<32x1xf32>
    %cst_13 = arith.constant 2.500000e-03 : f32
    %24 = vector.broadcast %cst_13 : f32 to vector<32x1xf32>
    %25 = arith.mulf %23, %24 : vector<32x1xf32>
    %cst_14 = arith.constant 9.99999974E-6 : f32
    %26 = vector.broadcast %cst_14 : f32 to vector<32x1xf32>
    %27 = arith.addf %25, %26 : vector<32x1xf32>
    %28 = math.rsqrt %27 : vector<32x1xf32>
    %29 = vector.broadcast %28 : vector<32x1xf32> to vector<32x512xf32>
    %30 = arith.mulf %20, %29 : vector<32x512xf32>
    %31 = vector.broadcast %3 : vector<1x512xf32> to vector<32x512xf32>
    %32 = arith.mulf %30, %31 : vector<32x512xf32>
    %33 = vector.broadcast %4 : vector<1x512xf32> to vector<32x512xf32>
    %34 = arith.addf %32, %33 : vector<32x512xf32>
    %cst_15 = arith.constant 0.000000e+00 : f32
    %35 = vector.broadcast %cst_15 : f32 to vector<32x512xf32>
    %36 = arith.maximumf %34, %35 : vector<32x512xf32>
    %c0_16 = arith.constant 0 : index
    %c0_17 = arith.constant 0 : index
    %37 = vector.load %arg6[%c0_16, %c0_17] : memref<10x384xf32, #tpu.memory_space<vmem>>, vector<1x384xf32>
    %c1_18 = arith.constant 1 : index
    %c0_19 = arith.constant 0 : index
    %38 = vector.load %arg6[%c1_18, %c0_19] : memref<10x384xf32, #tpu.memory_space<vmem>>, vector<1x384xf32>
    %c2_20 = arith.constant 2 : index
    %c0_21 = arith.constant 0 : index
    %39 = vector.load %arg6[%c2_20, %c0_21] : memref<10x384xf32, #tpu.memory_space<vmem>>, vector<1x384xf32>
    %40 = arith.truncf %36 : vector<32x512xf32> to vector<32x512xbf16>
    %c0_22 = arith.constant 0 : index
    %c0_23 = arith.constant 0 : index
    %41 = vector.load %arg4[%c0_22, %c0_23] : memref<512x384xbf16, #tpu.memory_space<vmem>>, vector<512x384xbf16>
    %cst_24 = arith.constant dense<0.000000e+00> : vector<32x384xf32>
    %42 = tpu.matmul %40, %41, %cst_24 {dimension_numbers = #tpu.dot_dimension_numbers<[1], [0], [0], [1], [0, 0, 1, 1], [], []>} : vector<32x512xbf16>, vector<512x384xbf16>, vector<32x384xf32> -> vector<32x384xf32>
    %43 = vector.broadcast %37 : vector<1x384xf32> to vector<32x384xf32>
    %44 = arith.addf %42, %43 : vector<32x384xf32>
    %45 = tpu.iota {dimensions = array<i32: 1>} : vector<32x384xi32>
    %c300_i32 = arith.constant 300 : i32
    %46 = vector.broadcast %c300_i32 : i32 to vector<32x384xi32>
    %47 = arith.cmpi slt, %45, %46 : vector<32x384xi32>
    %cst_25 = arith.constant dense<0.000000e+00> : vector<32xf32>
    %48 = vector.multi_reduction <add>, %44, %cst_25 [1] : vector<32x384xf32> to vector<32xf32>
    %49 = vector.shape_cast %48 : vector<32xf32> to vector<32x1xf32>
    %cst_26 = arith.constant 0.00333333341 : f32
    %50 = vector.broadcast %cst_26 : f32 to vector<32x1xf32>
    %51 = arith.mulf %49, %50 : vector<32x1xf32>
    %52 = vector.broadcast %51 : vector<32x1xf32> to vector<32x384xf32>
    %53 = arith.subf %44, %52 : vector<32x384xf32>
    %cst_27 = arith.constant 0.000000e+00 : f32
    %54 = vector.broadcast %cst_27 : f32 to vector<32x384xf32>
    %55 = arith.select %47, %53, %54 : vector<32x384xi1>, vector<32x384xf32>
    %56 = arith.mulf %55, %55 : vector<32x384xf32>
    %cst_28 = arith.constant dense<0.000000e+00> : vector<32xf32>
    %57 = vector.multi_reduction <add>, %56, %cst_28 [1] : vector<32x384xf32> to vector<32xf32>
    %58 = vector.shape_cast %57 : vector<32xf32> to vector<32x1xf32>
    %cst_29 = arith.constant 0.00333333341 : f32
    %59 = vector.broadcast %cst_29 : f32 to vector<32x1xf32>
    %60 = arith.mulf %58, %59 : vector<32x1xf32>
    %cst_30 = arith.constant 9.99999974E-6 : f32
    %61 = vector.broadcast %cst_30 : f32 to vector<32x1xf32>
    %62 = arith.addf %60, %61 : vector<32x1xf32>
    %63 = math.rsqrt %62 : vector<32x1xf32>
    %64 = vector.broadcast %63 : vector<32x1xf32> to vector<32x384xf32>
    %65 = arith.mulf %55, %64 : vector<32x384xf32>
    %66 = vector.broadcast %38 : vector<1x384xf32> to vector<32x384xf32>
    %67 = arith.mulf %65, %66 : vector<32x384xf32>
    %68 = vector.broadcast %39 : vector<1x384xf32> to vector<32x384xf32>
    %69 = arith.addf %67, %68 : vector<32x384xf32>
    %c3 = arith.constant 3 : index
    %c0_31 = arith.constant 0 : index
    %70 = vector.load %arg6[%c3, %c0_31] : memref<10x384xf32, #tpu.memory_space<vmem>>, vector<1x384xf32>
    %71 = vector.extract_strided_slice %1 {offsets = [0, 0], sizes = [32, 1], strides = [1, 1]} : vector<32x4xf32> to vector<32x1xf32>
    %c4 = arith.constant 4 : index
    %c0_32 = arith.constant 0 : index
    %72 = vector.load %arg6[%c4, %c0_32] : memref<10x384xf32, #tpu.memory_space<vmem>>, vector<1x384xf32>
    %73 = vector.broadcast %71 : vector<32x1xf32> to vector<32x384xf32>
    %74 = vector.broadcast %72 : vector<1x384xf32> to vector<32x384xf32>
    %75 = arith.mulf %73, %74 : vector<32x384xf32>
    %76 = vector.broadcast %70 : vector<1x384xf32> to vector<32x384xf32>
    %77 = arith.addf %76, %75 : vector<32x384xf32>
    %78 = vector.extract_strided_slice %1 {offsets = [0, 1], sizes = [32, 1], strides = [1, 1]} : vector<32x4xf32> to vector<32x1xf32>
    %c5 = arith.constant 5 : index
    %c0_33 = arith.constant 0 : index
    %79 = vector.load %arg6[%c5, %c0_33] : memref<10x384xf32, #tpu.memory_space<vmem>>, vector<1x384xf32>
    %80 = vector.broadcast %78 : vector<32x1xf32> to vector<32x384xf32>
    %81 = vector.broadcast %79 : vector<1x384xf32> to vector<32x384xf32>
    %82 = arith.mulf %80, %81 : vector<32x384xf32>
    %83 = arith.addf %77, %82 : vector<32x384xf32>
    %84 = vector.extract_strided_slice %1 {offsets = [0, 2], sizes = [32, 1], strides = [1, 1]} : vector<32x4xf32> to vector<32x1xf32>
    %c6 = arith.constant 6 : index
    %c0_34 = arith.constant 0 : index
    %85 = vector.load %arg6[%c6, %c0_34] : memref<10x384xf32, #tpu.memory_space<vmem>>, vector<1x384xf32>
    %86 = vector.broadcast %84 : vector<32x1xf32> to vector<32x384xf32>
    %87 = vector.broadcast %85 : vector<1x384xf32> to vector<32x384xf32>
    %88 = arith.mulf %86, %87 : vector<32x384xf32>
    %89 = arith.addf %83, %88 : vector<32x384xf32>
    %90 = vector.extract_strided_slice %1 {offsets = [0, 3], sizes = [32, 1], strides = [1, 1]} : vector<32x4xf32> to vector<32x1xf32>
    %c7 = arith.constant 7 : index
    %c0_35 = arith.constant 0 : index
    %91 = vector.load %arg6[%c7, %c0_35] : memref<10x384xf32, #tpu.memory_space<vmem>>, vector<1x384xf32>
    %92 = vector.broadcast %90 : vector<32x1xf32> to vector<32x384xf32>
    %93 = vector.broadcast %91 : vector<1x384xf32> to vector<32x384xf32>
    %94 = arith.mulf %92, %93 : vector<32x384xf32>
    %95 = arith.addf %89, %94 : vector<32x384xf32>
    %96 = arith.addf %69, %95 : vector<32x384xf32>
    %cst_36 = arith.constant 0.000000e+00 : f32
    %97 = vector.broadcast %cst_36 : f32 to vector<32x384xf32>
    %98 = arith.maximumf %96, %97 : vector<32x384xf32>
    %c8 = arith.constant 8 : index
    %c0_37 = arith.constant 0 : index
    %99 = vector.load %arg6[%c8, %c0_37] : memref<10x384xf32, #tpu.memory_space<vmem>>, vector<1x384xf32>
    %c9 = arith.constant 9 : index
    %c0_38 = arith.constant 0 : index
    %100 = vector.load %arg6[%c9, %c0_38] : memref<10x384xf32, #tpu.memory_space<vmem>>, vector<1x1xf32>
    %101 = vector.broadcast %99 : vector<1x384xf32> to vector<32x384xf32>
    %102 = arith.mulf %98, %101 : vector<32x384xf32>
    %cst_39 = arith.constant dense<0.000000e+00> : vector<32xf32>
    %103 = vector.multi_reduction <add>, %102, %cst_39 [1] : vector<32x384xf32> to vector<32xf32>
    %104 = vector.shape_cast %103 : vector<32xf32> to vector<32x1xf32>
    %105 = vector.broadcast %100 : vector<1x1xf32> to vector<32x1xf32>
    %106 = arith.addf %104, %105 : vector<32x1xf32>
    %c0_40 = arith.constant 0 : index
    %c0_41 = arith.constant 0 : index
    %107 = vector.load %arg7[%c0_40, %c0_41] : memref<32x1xf32, #tpu.memory_space<vmem>>, vector<32x1xf32>
    tpu.vector_store %arg7[%c0_40, %c0_41], %106 {strides = array<i32>} : memref<32x1xf32, #tpu.memory_space<vmem>>, vector<32x1xf32>,
    return
  }
  func.func @transform_0(%arg0: i32) -> (i32, i32) {
    %c0_i32 = arith.constant 0 : i32
    %c0_i32_0 = arith.constant 0 : i32
    return %arg0, %c0_i32 : i32, i32
  }
  func.func @transform_1(%arg0: i32) -> (i32, i32) {
    %c0_i32 = arith.constant 0 : i32
    %c0_i32_0 = arith.constant 0 : i32
    return %arg0, %c0_i32 : i32, i32
  }
  func.func @transform_2(%arg0: i32) -> (i32, i32) {
    %c0_i32 = arith.constant 0 : i32
    %c0_i32_0 = arith.constant 0 : i32
    %c0_i32_1 = arith.constant 0 : i32
    return %c0_i32, %c0_i32_0 : i32, i32
  }
  func.func @transform_3(%arg0: i32) -> (i32, i32) {
    %c0_i32 = arith.constant 0 : i32
    %c0_i32_0 = arith.constant 0 : i32
    %c0_i32_1 = arith.constant 0 : i32
    return %c0_i32, %c0_i32_0 : i32, i32
  }
  func.func @transform_4(%arg0: i32) -> (i32, i32) {
    %c0_i32 = arith.constant 0 : i32
    %c0_i32_0 = arith.constant 0 : i32
    %c0_i32_1 = arith.constant 0 : i32
    return %c0_i32, %c0_i32_0 : i32, i32
  }
  func.func @transform_5(%arg0: i32) -> (i32, i32) {
    %c0_i32 = arith.constant 0 : i32
    %c0_i32_0 = arith.constant 0 : i32
    %c0_i32_1 = arith.constant 0 : i32
    return %c0_i32, %c0_i32_0 : i32, i32
  }
  func.func @transform_6(%arg0: i32) -> (i32, i32) {
    %c0_i32 = arith.constant 0 : i32
    %c0_i32_0 = arith.constant 0 : i32
    return %arg0, %c0_i32 : i32, i32
  }
}

</mosaic_0001>

<llo_original>
// kernel: critic_forward.1
$region0: #{critic_forward.1}
  #allocation0 [shape = 'u32[]', space=smem, size = 0x4, offset = 0x4, fixed_abs, tag = 'smem constant byte address 0x4 - core index']
  #allocation1 [shape = 'u32[144,128]{1,0:T(1,128)}', space=vmem, size = 0x12000, scoped, tag = 'internal scratch']
  %s0 = inlined_call_operand.vmem [shape: f32[64,16], index: 0, kind: input, shape index: {}]
  %s1 = inlined_call_operand.vmem [shape: f32[64,4], index: 1, kind: input, shape index: {}]
  %s2 = inlined_call_operand.vmem [shape: bf16[16,512], index: 2, kind: input, shape index: {}]
  %s3 = inlined_call_operand.hbm [shape: bf16[512,384], index: 3, kind: input, shape index: {}]
  %s4 = inlined_call_operand.vmem [shape: f32[3,512], index: 4, kind: input, shape index: {}]
  %s5 = inlined_call_operand.vmem [shape: f32[10,384], index: 5, kind: input, shape index: {}]
  %s6 = inlined_call_operand.vmem [shape: f32[64,1], index: 6, kind: output, shape index: {}]
  %s7 = sld [smem:[#allocation0]]
  $region61: #{critic_forward.1} parent=0
    _
  %s9 = ssub.s32 1, %s7
  %s10 = scalar_select 0, %s9, %s7
  $region1: #{critic_forward.1} parent=0
    #allocation2 [shape = 'u8[393216]{0}', space=vmem, size = 0x60000, scoped, tag = 'input window, operand 3, single buffered']
    #allocation3 [shape = 's32[2]{0}', space=sflag, size = 0x8, scoped, tag = 'scoped memory for critic_forward.1']
    %11 = vsyncpa [#allocation3], 0
    loop: start=0, step=1, limit=4
    $region2: #{critic_forward.1} parent=1 // loop_pre_header
      _
    $region3: #{critic_forward.1} parent=1 // loop_header
      %s13 = sphi 0, %s17
      %p14 = scmp.ge.s32.totalorder %s13, 4
      %s23 = sphi 0, %s25
      %s26 = sphi 0, %s23
      %s27 = sphi 0, %s26
      %s43 = sphi 0, %s27
      %s49 = sphi 0, %s51
      %s52 = sphi 0, %s49
      %s53 = sphi 0, %s52
      %s69 = sphi 0, %s53
      %s73 = sphi 0, %s73
      %s75 = sphi 0, %s73
      %s76 = sphi 0, %s75
      %s90 = sphi 0, %s76
      %s94 = sphi 0, %s94
      %s96 = sphi 0, %s94
      %s97 = sphi 0, %s96
      %s111 = sphi 0, %s97
      %s115 = sphi 0, %s115
      %s117 = sphi 0, %s115
      %s118 = sphi 0, %s117
      %s132 = sphi 0, %s118
      %s136 = sphi 0, %s136
      %s138 = sphi 0, %s136
      %s139 = sphi 0, %s138
      %s153 = sphi 0, %s139
      %s159 = sphi 0, %s161
      %s162 = sphi 0, %s159
      %s163 = sphi 0, %s162
      %s179 = sphi 0, %s163
    $region4: #{critic_forward.1} parent=1 // loop_header_branch
      %16 = sbr.rel (%p14) target = $region8
    $region5: #{critic_forward.1} parent=1 // loop_body
      %s18 = ssub.s32 %s13, 1
      %s19 = ssub.s32 %s13, 2
      %s20 = sadd.s32 %s13, 1
      %s21 = ssub.s32 %s13, %s20
      %p22 = scmp.eq.s32.totalorder %s21, 0
      %s24 = sadd.s32 %s23, 1
      %s25 = scalar_select %p22, %s23, %s24
      %p28 = pneg %p22
      %p29 = scmp.eq.s32.totalorder %s13, 1
      %p30 = por %p28, %p29
      %p31 = scmp.ne.s32.totalorder %s23, %s26
      %p32 = scmp.eq.s32.totalorder %s13, 0
      %p33 = por %p31, %p32
      %p34 = scmp.ne.s32.totalorder %s23, %s26
      %p35 = scmp.eq.s32.totalorder %s18, 1
      %p36 = por %p34, %p35
      %p37 = scmp.ne.s32.totalorder %s26, %s27
      %p38 = scmp.eq.s32.totalorder %s18, 0
      %p39 = por %p37, %p38
      %p40 = scmp.ne.s32.totalorder %s26, %s27
      %p41 = scmp.eq.s32.totalorder %s19, 1
      %p42 = por %p40, %p41
      %p44 = scmp.ne.s32.totalorder %s27, %s43
      %p45 = scmp.eq.s32.totalorder %s19, 0
      %p46 = por %p44, %p45
      %s47 = ssub.s32 %s13, %s20
      %p48 = scmp.eq.s32.totalorder %s47, 0
      %s50 = sadd.s32 %s49, 1
      %s51 = scalar_select %p48, %s49, %s50
      %p54 = pneg %p48
      %p55 = scmp.eq.s32.totalorder %s13, 1
      %p56 = por %p54, %p55
      %p57 = scmp.ne.s32.totalorder %s49, %s52
      %p58 = scmp.eq.s32.totalorder %s13, 0
      %p59 = por %p57, %p58
      %p60 = scmp.ne.s32.totalorder %s49, %s52
      %p61 = scmp.eq.s32.totalorder %s18, 1
      %p62 = por %p60, %p61
      %p63 = scmp.ne.s32.totalorder %s52, %s53
      %p64 = scmp.eq.s32.totalorder %s18, 0
      %p65 = por %p63, %p64
      %p66 = scmp.ne.s32.totalorder %s52, %s53
      %p67 = scmp.eq.s32.totalorder %s19, 1
      %p68 = por %p66, %p67
      %p70 = scmp.ne.s32.totalorder %s53, %s69
      %p71 = scmp.eq.s32.totalorder %s19, 0
      %p72 = por %p70, %p71
      %s74 = sadd.s32 %s73, 1
      %p77 = scmp.eq.s32.totalorder %s13, 1
      %p78 = scmp.ne.s32.totalorder %s73, %s75
      %p79 = scmp.eq.s32.totalorder %s13, 0
      %p80 = por %p78, %p79
      %p81 = scmp.ne.s32.totalorder %s73, %s75
      %p82 = scmp.eq.s32.totalorder %s18, 1
      %p83 = por %p81, %p82
      %p84 = scmp.ne.s32.totalorder %s75, %s76
      %p85 = scmp.eq.s32.totalorder %s18, 0
      %p86 = por %p84, %p85
      %p87 = scmp.ne.s32.totalorder %s75, %s76
      %p88 = scmp.eq.s32.totalorder %s19, 1
      %p89 = por %p87, %p88
      %p91 = scmp.ne.s32.totalorder %s76, %s90
      %p92 = scmp.eq.s32.totalorder %s19, 0
      %p93 = por %p91, %p92
      %s95 = sadd.s32 %s94, 1
      %p98 = scmp.eq.s32.totalorder %s13, 1
      %p99 = scmp.ne.s32.totalorder %s94, %s96
      %p100 = scmp.eq.s32.totalorder %s13, 0
      %p101 = por %p99, %p100
      %p102 = scmp.ne.s32.totalorder %s94, %s96
      %p103 = scmp.eq.s32.totalorder %s18, 1
      %p104 = por %p102, %p103
      %p105 = scmp.ne.s32.totalorder %s96, %s97
      %p106 = scmp.eq.s32.totalorder %s18, 0
      %p107 = por %p105, %p106
      %p108 = scmp.ne.s32.totalorder %s96, %s97
      %p109 = scmp.eq.s32.totalorder %s19, 1
      %p110 = por %p108, %p109
      %p112 = scmp.ne.s32.totalorder %s97, %s111
      %p113 = scmp.eq.s32.totalorder %s19, 0
      %p114 = por %p112, %p113
      %s116 = sadd.s32 %s115, 1
      %p119 = scmp.eq.s32.totalorder %s13, 1
      %p120 = scmp.ne.s32.totalorder %s115, %s117
      %p121 = scmp.eq.s32.totalorder %s13, 0
      %p122 = por %p120, %p121
      %p123 = scmp.ne.s32.totalorder %s115, %s117
      %p124 = scmp.eq.s32.totalorder %s18, 1
      %p125 = por %p123, %p124
      %p126 = scmp.ne.s32.totalorder %s117, %s118
      %p127 = scmp.eq.s32.totalorder %s18, 0
      %p128 = por %p126, %p127
      %p129 = scmp.ne.s32.totalorder %s117, %s118
      %p130 = scmp.eq.s32.totalorder %s19, 1
      %p131 = por %p129, %p130
      %p133 = scmp.ne.s32.totalorder %s118, %s132
      %p134 = scmp.eq.s32.totalorder %s19, 0
      %p135 = por %p133, %p134
      %s137 = sadd.s32 %s136, 1
      %p140 = scmp.eq.s32.totalorder %s13, 1
      %p141 = scmp.ne.s32.totalorder %s136, %s138
      %p142 = scmp.eq.s32.totalorder %s13, 0
      %p143 = por %p141, %p142
      %p144 = scmp.ne.s32.totalorder %s136, %s138
      %p145 = scmp.eq.s32.totalorder %s18, 1
      %p146 = por %p144, %p145
      %p147 = scmp.ne.s32.totalorder %s138, %s139
      %p148 = scmp.eq.s32.totalorder %s18, 0
      %p149 = por %p147, %p148
      %p150 = scmp.ne.s32.totalorder %s138, %s139
      %p151 = scmp.eq.s32.totalorder %s19, 1
      %p152 = por %p150, %p151
      %p154 = scmp.ne.s32.totalorder %s139, %s153
      %p155 = scmp.eq.s32.totalorder %s19, 0
      %p156 = por %p154, %p155
      %s157 = ssub.s32 %s13, %s20
      %p158 = scmp.eq.s32.totalorder %s157, 0
      %s160 = sadd.s32 %s159, 1
      %s161 = scalar_select %p158, %s159, %s160
      %p164 = pneg %p158
      %p165 = scmp.eq.s32.totalorder %s13, 1
      %p166 = por %p164, %p165
      %p167 = scmp.ne.s32.totalorder %s159, %s162
      %p168 = scmp.eq.s32.totalorder %s13, 0
      %p169 = por %p167, %p168
      %p170 = scmp.ne.s32.totalorder %s159, %s162
      %p171 = scmp.eq.s32.totalorder %s18, 1
      %p172 = por %p170, %p171
      %p173 = scmp.ne.s32.totalorder %s162, %s163
      %p174 = scmp.eq.s32.totalorder %s18, 0
      %p175 = por %p173, %p174
      %p176 = scmp.ne.s32.totalorder %s162, %s163
      %p177 = scmp.eq.s32.totalorder %s19, 1
      %p178 = por %p176, %p177
      %p180 = scmp.ne.s32.totalorder %s163, %s179
      %p181 = scmp.eq.s32.totalorder %s19, 0
      %p182 = por %p180, %p181
      %p183 = scmp.le.s32.totalorder 1, %s13
      %p184 = scmp.lt.s32.totalorder %s13, 3
      %p185 = pnand %p183, %p184
      %p186 = pneg %p185
      // Predicated region
      $region9: #{critic_forward.1} parent=5 // pred_check
        _
      $region10: #{critic_forward.1} parent=5 // pred_check_branch
        %188 = sbr.rel (%p185) target = $region12
      $region11: #{critic_forward.1} parent=5 // pred_region
        %s189 = ssub.s32 %s13, 1
        // Predicated region
        $region13: #{critic_forward.1} parent=11 // pred_check
          %p190 = pneg %p86
        $region14: #{critic_forward.1} parent=11 // pred_check_branch
          %192 = sbr.rel (%p190) target = $region16
        $region15: #{critic_forward.1} parent=11 // pred_region
          _
        $region16: #{critic_forward.1} parent=11 // pred_fallthru
          _
        // Predicated region
        $region17: #{critic_forward.1} parent=11 // pred_check
          %p193 = pneg %p107
        $region18: #{critic_forward.1} parent=11 // pred_check_branch
          %195 = sbr.rel (%p193) target = $region20
        $region19: #{critic_forward.1} parent=11 // pred_region
          %s197 = ssub.s32 12288, 12288
          %198 = vsyncadd [#allocation3], %s197
          %s199 = sshll.u32 [#allocation2], 4
          %s200 = int_to_ptr.vmem [resolvable:$true] %s199
          %205 = dma.hbm_to_vmem [thread:$0]  %s3, 12288, %s200, [#allocation3], 192, 192, 12
        $region20: #{critic_forward.1} parent=11 // pred_fallthru
          _
        // Predicated region
        $region21: #{critic_forward.1} parent=11 // pred_check
          %p206 = pneg %p128
        $region22: #{critic_forward.1} parent=11 // pred_check_branch
          %208 = sbr.rel (%p206) target = $region24
        $region23: #{critic_forward.1} parent=11 // pred_region
          _
        $region24: #{critic_forward.1} parent=11 // pred_fallthru
          _
        // Predicated region
        $region25: #{critic_forward.1} parent=11 // pred_check
          %p209 = pneg %p149
        $region26: #{critic_forward.1} parent=11 // pred_check_branch
          %211 = sbr.rel (%p209) target = $region28
        $region27: #{critic_forward.1} parent=11 // pred_region
          _
        $region28: #{critic_forward.1} parent=11 // pred_fallthru
          _
      $region12: #{critic_forward.1} parent=5 // pred_fallthru
        _
      %p212 = scmp.lt.s32.totalorder %s13, 2
      // Predicated region
      $region29: #{critic_forward.1} parent=5 // pred_check
        %p213 = pneg %p212
      $region30: #{critic_forward.1} parent=5 // pred_check_branch
        %215 = sbr.rel (%p213) target = $region32
      $region31: #{critic_forward.1} parent=5 // pred_region
        // Predicated region
        $region33: #{critic_forward.1} parent=31 // pred_check
          %p216 = pneg %p33
        $region34: #{critic_forward.1} parent=31 // pred_check_branch
          %218 = sbr.rel (%p216) target = $region36
        $region35: #{critic_forward.1} parent=31 // pred_region
          %s219 = smul.u32 4, %s13
          %p220 = scmp.lt.s32.totalorder %s219, 7
          %s221 = scalar_select %p220, %s219, 7
          %s222 = smul.addr %s221, 8
          %s223 = scalar_lea.vmem %s0, %s222
          %s224 = smul.u32 4, %s13
        $region36: #{critic_forward.1} parent=31 // pred_fallthru
          _
        // Predicated region
        $region37: #{critic_forward.1} parent=31 // pred_check
          %p225 = pneg %p59
        $region38: #{critic_forward.1} parent=31 // pred_check_branch
          %227 = sbr.rel (%p225) target = $region40
        $region39: #{critic_forward.1} parent=31 // pred_region
          %s228 = smul.u32 4, %s13
          %p229 = scmp.lt.s32.totalorder %s228, 7
          %s230 = scalar_select %p229, %s228, 7
          %s231 = smul.addr %s230, 8
          %s232 = scalar_lea.vmem %s1, %s231
          %s233 = smul.u32 4, %s13
        $region40: #{critic_forward.1} parent=31 // pred_fallthru
          _
      $region32: #{critic_forward.1} parent=5 // pred_fallthru
        _
      %p234 = scmp.le.s32.totalorder 1, %s13
      %p235 = scmp.lt.s32.totalorder %s13, 3
      %p236 = pnand %p234, %p235
      %p237 = pneg %p236
      // Predicated region
      $region41: #{critic_forward.1} parent=5 // pred_check
        _
      $region42: #{critic_forward.1} parent=5 // pred_check_branch
        %239 = sbr.rel (%p236) target = $region44
      $region43: #{critic_forward.1} parent=5 // pred_region
        %s240 = ssub.s32 %s13, 1
        // Predicated region
        $region45: #{critic_forward.1} parent=43 // pred_check
          %p241 = pneg %p107
        $region46: #{critic_forward.1} parent=43 // pred_check_branch
          %243 = sbr.rel (%p241) target = $region48
        $region47: #{critic_forward.1} parent=43 // pred_region
          %244 = dma.done [#allocation3], 12288
        $region48: #{critic_forward.1} parent=43 // pred_fallthru
          _
        %s245 = smul.u32 4, %s18
        %p246 = scmp.lt.s32.totalorder %s245, 7
        %s247 = scalar_select %p246, %s245, 7
        %s248 = smul.addr %s247, 8
        %s249 = scalar_lea.vmem %s0, %s248
        %p250 = pneg %p39
        %p251 = pneg %p36
        %s252 = smul.u32 4, %s18
        %p253 = scmp.lt.s32.totalorder %s252, 7
        %s254 = scalar_select %p253, %s252, 7
        %s255 = smul.addr %s254, 8
        %s256 = scalar_lea.vmem %s1, %s255
        %p257 = pneg %p65
        %p258 = pneg %p62
        %p259 = pneg %p86
        %p260 = pneg %p83
        %p261 = pneg %p107
        %p262 = pneg %p104
        %p263 = pneg %p128
        %p264 = pneg %p125
        %p265 = pneg %p149
        %p266 = pneg %p146
        %p267 = pneg %p175
        %p268 = pneg %p172
        %s269 = smul.u32 4, %s18
        %p270 = scmp.lt.s32.totalorder %s269, 7
        %s271 = scalar_select %p270, %s269, 7
        %s272 = smul.addr %s271, 8
        %s273 = scalar_lea.vmem %s6, %s272
        %s274 = smul.u32 4, %s18
        %p275 = scmp.lt.s32.totalorder %s274, 7
        %s276 = scalar_select %p275, %s274, 7
        %s277 = smul.addr %s276, 8
        %s278 = scalar_lea.vmem %s0, %s277
        %s279 = smul.u32 4, %s18
        %s280 = smul.u32 4, %s18
        %p281 = scmp.lt.s32.totalorder %s280, 7
        %s282 = scalar_select %p281, %s280, 7
        %s283 = smul.addr %s282, 8
        %s284 = scalar_lea.vmem %s1, %s283
        %s285 = smul.u32 4, %s18
        %s286 = smul.u32 4, %s18
        %p287 = scmp.lt.s32.totalorder %s286, 7
        %s288 = scalar_select %p287, %s286, 7
        %s289 = smul.addr %s288, 8
        %s290 = scalar_lea.vmem %s6, %s289
        %s291 = smul.u32 4, %s18
        %v293 = vld [vmem:[%s278] sm:$0xff]
        %v294 = vld [vmem:[%s278 + $0x8] sm:$0xff]
        %v295 = vld [vmem:[%s278 + $0x10] sm:$0xff]
        %v296 = vld [vmem:[%s278 + $0x18] sm:$0xff]
        %v297 = vld [vmem:[%s284] sm:$0xff]
        %v298 = vld [vmem:[%s284 + $0x8] sm:$0xff]
        %v299 = vld [vmem:[%s284 + $0x10] sm:$0xff]
        %v300 = vld [vmem:[%s284 + $0x18] sm:$0xff]
        %v301 = vld [vmem:[%s4] ss:$4 sm:$0xf]
        %s302 = scalar_lea.vmem %s4, 1
        %v303 = vld [vmem:[%s302] ss:$4 sm:$0xf]
        %s304 = scalar_lea.vmem %s4, 2
        %v305 = vld [vmem:[%s304] ss:$4 sm:$0xf]
        %v306 = vpack.c.bf16 %v294, %v293
        %v307 = vpack.c.bf16 %v296, %v295
        %v308 = vld [vmem:[%s2] sm:$0xff]
        %v309 = vld [vmem:[%s2 + $0x8] sm:$0xff]
        %v310 = vld [vmem:[%s2 + $0x10] sm:$0xff]
        %v311 = vld [vmem:[%s2 + $0x18] sm:$0xff]
        %v313 = vlaneseq
        %v314 = vshrl.u32 %v313, 7
        %v315 = vsub.s32 0, %v314
        %v316 = vrot.slane %v301, %v315
        %v317 = vlaneseq
        %v318 = vshrl.u32 %v317, 7
        %v319 = vsub.s32 1, %v318
        %v320 = vrot.slane %v301, %v319
        %v321 = vlaneseq
        %v322 = vshrl.u32 %v321, 7
        %v323 = vsub.s32 2, %v322
        %v324 = vrot.slane %v301, %v323
        %v325 = vlaneseq
        %v326 = vshrl.u32 %v325, 7
        %v327 = vsub.s32 3, %v326
        %v328 = vrot.slane %v301, %v327
        %v337 = vunpack.c.l.b16 %v308
        %v338 = vunpack.c.h.b16 %v308
        %v339 = vunpack.c.l.b16 %v309
        %v340 = vunpack.c.h.b16 %v309
        %v341 = vunpack.c.l.b16 %v310
        %v342 = vunpack.c.h.b16 %v310
        %v343 = vunpack.c.l.b16 %v311
        %v344 = vunpack.c.h.b16 %v311
        %v345 = vpack.c.b16 %v341, %v337
        %v346 = vpack.c.b16 %v342, %v338
        %v347 = vpack.c.b16 %v343, %v339
        %v348 = vpack.c.b16 %v344, %v340
        %vm353 = vcmask 130048
        %v355 = vsel %vm353, %v306, 0
        %v358 = vsel %vm353, %v307, 0
        %360 = vmatprep.subr.bf16.mxu0 %v346
        %361 = vmatpush1.bf16.msra.mxu0 %v345
        %362 = vmatprep.subr.bf16.mxu0 0
        %363 = vmatpush1.bf16.msra.mxu0 0
        %364 = vmatprep.subr.bf16.mxu0 0
        %365 = vmatpush1.bf16.msra.mxu0 0
        %366 = vmatprep.subr.bf16.mxu0 0
        %367 = vmatpush1.bf16.msra.mxu0 0
        %368 = vmatprep.subr.bf16.mxu0 0
        %369 = vmatpush1.bf16.msra.mxu0 0
        %370 = vmatprep.subr.bf16.mxu0 0
        %371 = vmatpush1.bf16.msra.mxu0 0
        %372 = vmatprep.subr.bf16.mxu0 0
        %373 = vmatpush1.bf16.msra.mxu0 0
        %374 = vmatprep.subr.bf16.mxu0 0
        %375 = vmatpush1.bf16.msra.mxu0 0
        %376 = vmatprep.subr.bf16.mxu0 0
        %377 = vmatpush1.bf16.msra.mxu0 0
        %378 = vmatprep.subr.bf16.mxu0 0
        %379 = vmatpush1.bf16.msra.mxu0 0
        %380 = vmatprep.subr.bf16.mxu0 0
        %381 = vmatpush1.bf16.msra.mxu0 0
        %382 = vmatprep.subr.bf16.mxu0 0
        %383 = vmatpush1.bf16.msra.mxu0 0
        %384 = vmatprep.subr.bf16.mxu0 0
        %385 = vmatpush1.bf16.msra.mxu0 0
        %386 = vmatprep.subr.bf16.mxu0 0
        %387 = vmatpush1.bf16.msra.mxu0 0
        %388 = vmatprep.subr.bf16.mxu0 0
        %389 = vmatpush1.bf16.msra.mxu0 0
        %390 = vmatprep.subr.bf16.mxu0 0
        %391 = vmatpush1.bf16.msra.mxu0 0
        %392 = vmatprep.mubr.bf16.mxu0 0
        %393 = vmatmul.mubr.bf16.gmra.mrb[0].mxu0 %v355
        %v394 = vpop.f32.mrb[0].mxu0
        %v395 = vadd.f32 %v316, %v394
        %v396 = vpop.f32.mrb[0].mxu0
        %v397 = vadd.f32 %v320, %v396
        %v398 = vpop.f32.mrb[0].mxu0
        %v399 = vadd.f32 %v316, %v398
        %v400 = vpop.f32.mrb[0].mxu0
        %v401 = vadd.f32 %v320, %v400
        %402 = vmatprep.mubr.bf16.mxu0 0
        %403 = vmatmul.mubr.bf16.gmra.mrb[0].mxu0 %v358
        %v404 = vpop.f32.mrb[0].mxu0
        %v405 = vadd.f32 %v316, %v404
        %v406 = vpop.f32.mrb[0].mxu0
        %v407 = vadd.f32 %v320, %v406
        %v408 = vpop.f32.mrb[0].mxu0
        %v409 = vadd.f32 %v316, %v408
        %v410 = vpop.f32.mrb[0].mxu0
        %v411 = vadd.f32 %v320, %v410
        %412 = vdwg.mxu0
        %413 = vmatprep.subr.bf16.mxu0 %v348
        %414 = vmatpush1.bf16.msra.mxu0 %v347
        %415 = vmatprep.subr.bf16.mxu0 0
        %416 = vmatpush1.bf16.msra.mxu0 0
        %417 = vmatprep.subr.bf16.mxu0 0
        %418 = vmatpush1.bf16.msra.mxu0 0
        %419 = vmatprep.subr.bf16.mxu0 0
        %420 = vmatpush1.bf16.msra.mxu0 0
        %421 = vmatprep.subr.bf16.mxu0 0
        %422 = vmatpush1.bf16.msra.mxu0 0
        %423 = vmatprep.subr.bf16.mxu0 0
        %424 = vmatpush1.bf16.msra.mxu0 0
        %425 = vmatprep.subr.bf16.mxu0 0
        %426 = vmatpush1.bf16.msra.mxu0 0
        %427 = vmatprep.subr.bf16.mxu0 0
        %428 = vmatpush1.bf16.msra.mxu0 0
        %429 = vmatprep.subr.bf16.mxu0 0
        %430 = vmatpush1.bf16.msra.mxu0 0
        %431 = vmatprep.subr.bf16.mxu0 0
        %432 = vmatpush1.bf16.msra.mxu0 0
        %433 = vmatprep.subr.bf16.mxu0 0
        %434 = vmatpush1.bf16.msra.mxu0 0
        %435 = vmatprep.subr.bf16.mxu0 0
        %436 = vmatpush1.bf16.msra.mxu0 0
        %437 = vmatprep.subr.bf16.mxu0 0
        %438 = vmatpush1.bf16.msra.mxu0 0
        %439 = vmatprep.subr.bf16.mxu0 0
        %440 = vmatpush1.bf16.msra.mxu0 0
        %441 = vmatprep.subr.bf16.mxu0 0
        %442 = vmatpush1.bf16.msra.mxu0 0
        %443 = vmatprep.subr.bf16.mxu0 0
        %444 = vmatpush1.bf16.msra.mxu0 0
        %445 = vmatprep.mubr.bf16.mxu0 0
        %446 = vmatmul.mubr.bf16.gmra.mrb[0].mxu0 %v355
        %v447 = vpop.f32.mrb[0].mxu0
        %v448 = vadd.f32 %v324, %v447
        %v449 = vpop.f32.mrb[0].mxu0
        %v450 = vadd.f32 %v328, %v449
        %v451 = vpop.f32.mrb[0].mxu0
        %v452 = vadd.f32 %v324, %v451
        %v453 = vpop.f32.mrb[0].mxu0
        %v454 = vadd.f32 %v328, %v453
        %455 = vmatprep.mubr.bf16.mxu0 0
        %456 = vmatmul.mubr.bf16.gmra.mrb[0].mxu0 %v358
        %v457 = vpop.f32.mrb[0].mxu0
        %v458 = vadd.f32 %v324, %v457
        %v459 = vpop.f32.mrb[0].mxu0
        %v460 = vadd.f32 %v328, %v459
        %v461 = vpop.f32.mrb[0].mxu0
        %v462 = vadd.f32 %v324, %v461
        %v463 = vpop.f32.mrb[0].mxu0
        %v464 = vadd.f32 %v328, %v463
        %465 = vdwg.mxu0
        %v466 = vlaneseq
        %v467 = vand.u32 %v466, 127
        %v468 = vadd.s32 %v467, 128
        %v469 = vadd.s32 %v467, 256
        %v470 = vadd.s32 %v467, 384
        %vm471 = vcmp.lt.s32.totalorder %v467, 400
        %vm472 = vcmp.lt.s32.totalorder %v468, 400
        %vm473 = vcmp.lt.s32.totalorder %v469, 400
        %vm474 = vcmp.lt.s32.totalorder %v470, 400
        %v475 = vadd.f32 %v395, %v397
        %v476 = vadd.f32 %v475, %v448
        %v477 = vadd.f32 %v476, %v450
        %478 = vadd.xlane.f32.xlu0 %v477
        %v479 = vpop.xlane.xlu0 %478
        %v480 = vadd.f32 %v399, %v401
        %v481 = vadd.f32 %v480, %v452
        %v482 = vadd.f32 %v481, %v454
        %483 = vadd.xlane.f32.xlu0 %v482
        %v484 = vpop.xlane.xlu0 %483
        %v485 = vadd.f32 %v405, %v407
        %v486 = vadd.f32 %v485, %v458
        %v487 = vadd.f32 %v486, %v460
        %488 = vadd.xlane.f32.xlu0 %v487
        %v489 = vpop.xlane.xlu0 %488
        %v490 = vadd.f32 %v409, %v411
        %v491 = vadd.f32 %v490, %v462
        %v492 = vadd.f32 %v491, %v464
        %493 = vadd.xlane.f32.xlu0 %v492
        %v494 = vpop.xlane.xlu0 %493
        %v495 = vmul.f32 %v479, 0.0025
        %v496 = vmul.f32 %v484, 0.0025
        %v497 = vmul.f32 %v489, 0.0025
        %v498 = vmul.f32 %v494, 0.0025
        %v499 = vsub.f32 %v395, %v495
        %v500 = vsub.f32 %v397, %v495
        %v501 = vsub.f32 %v448, %v495
        %v502 = vsub.f32 %v450, %v495
        %v503 = vsub.f32 %v399, %v496
        %v504 = vsub.f32 %v401, %v496
        %v505 = vsub.f32 %v452, %v496
        %v506 = vsub.f32 %v454, %v496
        %v507 = vsub.f32 %v405, %v497
        %v508 = vsub.f32 %v407, %v497
        %v509 = vsub.f32 %v458, %v497
        %v510 = vsub.f32 %v460, %v497
        %v511 = vsub.f32 %v409, %v498
        %v512 = vsub.f32 %v411, %v498
        %v513 = vsub.f32 %v462, %v498
        %v514 = vsub.f32 %v464, %v498
        %v515 = vsel %vm471, %v499, 0.0
        %v516 = vsel %vm472, %v500, 0.0
        %v517 = vsel %vm473, %v501, 0.0
        %v518 = vsel %vm474, %v502, 0.0
        %v519 = vsel %vm471, %v503, 0.0
        %v520 = vsel %vm472, %v504, 0.0
        %v521 = vsel %vm473, %v505, 0.0
        %v522 = vsel %vm474, %v506, 0.0
        %v523 = vsel %vm471, %v507, 0.0
        %v524 = vsel %vm472, %v508, 0.0
        %v525 = vsel %vm473, %v509, 0.0
        %v526 = vsel %vm474, %v510, 0.0
        %v527 = vsel %vm471, %v511, 0.0
        %v528 = vsel %vm472, %v512, 0.0
        %v529 = vsel %vm473, %v513, 0.0
        %v530 = vsel %vm474, %v514, 0.0
        %v531 = vmul.f32 %v515, %v515
        %v532 = vmul.f32 %v516, %v516
        %v533 = vmul.f32 %v517, %v517
        %v534 = vmul.f32 %v518, %v518
        %v535 = vmul.f32 %v519, %v519
        %v536 = vmul.f32 %v520, %v520
        %v537 = vmul.f32 %v521, %v521
        %v538 = vmul.f32 %v522, %v522
        %v539 = vmul.f32 %v523, %v523
        %v540 = vmul.f32 %v524, %v524
        %v541 = vmul.f32 %v525, %v525
        %v542 = vmul.f32 %v526, %v526
        %v543 = vmul.f32 %v527, %v527
        %v544 = vmul.f32 %v528, %v528
        %v545 = vmul.f32 %v529, %v529
        %v546 = vmul.f32 %v530, %v530
        %v547 = vadd.f32 %v531, %v532
        %v548 = vadd.f32 %v547, %v533
        %v549 = vadd.f32 %v548, %v534
        %550 = vadd.xlane.f32.xlu0 %v549
        %v551 = vpop.xlane.xlu0 %550
        %v552 = vadd.f32 %v535, %v536
        %v553 = vadd.f32 %v552, %v537
        %v554 = vadd.f32 %v553, %v538
        %555 = vadd.xlane.f32.xlu0 %v554
        %v556 = vpop.xlane.xlu0 %555
        %v557 = vadd.f32 %v539, %v540
        %v558 = vadd.f32 %v557, %v541
        %v559 = vadd.f32 %v558, %v542
        %560 = vadd.xlane.f32.xlu0 %v559
        %v561 = vpop.xlane.xlu0 %560
        %v562 = vadd.f32 %v543, %v544
        %v563 = vadd.f32 %v562, %v545
        %v564 = vadd.f32 %v563, %v546
        %565 = vadd.xlane.f32.xlu0 %v564
        %v566 = vpop.xlane.xlu0 %565
        %v567 = vmul.f32 %v551, 0.0025
        %v568 = vmul.f32 %v556, 0.0025
        %v569 = vmul.f32 %v561, 0.0025
        %v570 = vmul.f32 %v566, 0.0025
        %v571 = vadd.f32 %v567, 1e-05
        %v572 = vadd.f32 %v568, 1e-05
        %v573 = vadd.f32 %v569, 1e-05
        %v574 = vadd.f32 %v570, 1e-05
        %v575 = vrsqrt.pop %v571
        %v576 = vrsqrt.pop %v572
        %v577 = vrsqrt.pop %v573
        %v578 = vrsqrt.pop %v574
        %v579 = vmul.f32 %v515, %v575
        %v580 = vmul.f32 %v516, %v575
        %v581 = vmul.f32 %v517, %v575
        %v582 = vmul.f32 %v518, %v575
        %v583 = vmul.f32 %v519, %v576
        %v584 = vmul.f32 %v520, %v576
        %v585 = vmul.f32 %v521, %v576
        %v586 = vmul.f32 %v522, %v576
        %v587 = vmul.f32 %v523, %v577
        %v588 = vmul.f32 %v524, %v577
        %v589 = vmul.f32 %v525, %v577
        %v590 = vmul.f32 %v526, %v577
        %v591 = vmul.f32 %v527, %v578
        %v592 = vmul.f32 %v528, %v578
        %v593 = vmul.f32 %v529, %v578
        %v594 = vmul.f32 %v530, %v578
        %v596 = vlaneseq
        %v597 = vshrl.u32 %v596, 7
        %v598 = vsub.s32 0, %v597
        %v599 = vrot.slane %v303, %v598
        %v600 = vlaneseq
        %v601 = vshrl.u32 %v600, 7
        %v602 = vsub.s32 1, %v601
        %v603 = vrot.slane %v303, %v602
        %v604 = vlaneseq
        %v605 = vshrl.u32 %v604, 7
        %v606 = vsub.s32 2, %v605
        %v607 = vrot.slane %v303, %v606
        %v608 = vlaneseq
        %v609 = vshrl.u32 %v608, 7
        %v610 = vsub.s32 3, %v609
        %v611 = vrot.slane %v303, %v610
        %v616 = vmul.f32 %v579, %v599
        %v617 = vmul.f32 %v580, %v603
        %v618 = vmul.f32 %v581, %v607
        %v619 = vmul.f32 %v582, %v611
        %v620 = vmul.f32 %v583, %v599
        %v621 = vmul.f32 %v584, %v603
        %v622 = vmul.f32 %v585, %v607
        %v623 = vmul.f32 %v586, %v611
        %v624 = vmul.f32 %v587, %v599
        %v625 = vmul.f32 %v588, %v603
        %v626 = vmul.f32 %v589, %v607
        %v627 = vmul.f32 %v590, %v611
        %v628 = vmul.f32 %v591, %v599
        %v629 = vmul.f32 %v592, %v603
        %v630 = vmul.f32 %v593, %v607
        %v631 = vmul.f32 %v594, %v611
        %v633 = vlaneseq
        %v634 = vshrl.u32 %v633, 7
        %v635 = vsub.s32 0, %v634
        %v636 = vrot.slane %v305, %v635
        %v637 = vlaneseq
        %v638 = vshrl.u32 %v637, 7
        %v639 = vsub.s32 1, %v638
        %v640 = vrot.slane %v305, %v639
        %v641 = vlaneseq
        %v642 = vshrl.u32 %v641, 7
        %v643 = vsub.s32 2, %v642
        %v644 = vrot.slane %v305, %v643
        %v645 = vlaneseq
        %v646 = vshrl.u32 %v645, 7
        %v647 = vsub.s32 3, %v646
        %v648 = vrot.slane %v305, %v647
        %v653 = vadd.f32 %v616, %v636
        %v654 = vadd.f32 %v617, %v640
        %v655 = vadd.f32 %v618, %v644
        %v656 = vadd.f32 %v619, %v648
        %v657 = vadd.f32 %v620, %v636
        %v658 = vadd.f32 %v621, %v640
        %v659 = vadd.f32 %v622, %v644
        %v660 = vadd.f32 %v623, %v648
        %v661 = vadd.f32 %v624, %v636
        %v662 = vadd.f32 %v625, %v640
        %v663 = vadd.f32 %v626, %v644
        %v664 = vadd.f32 %v627, %v648
        %v665 = vadd.f32 %v628, %v636
        %v666 = vadd.f32 %v629, %v640
        %v667 = vadd.f32 %v630, %v644
        %v668 = vadd.f32 %v631, %v648
        %v669 = vmax.f32 %v653, 0.0
        %v670 = vmax.f32 %v654, 0.0
        %v671 = vmax.f32 %v655, 0.0
        %v672 = vmax.f32 %v656, 0.0
        %v673 = vmax.f32 %v657, 0.0
        %v674 = vmax.f32 %v658, 0.0
        %v675 = vmax.f32 %v659, 0.0
        %v676 = vmax.f32 %v660, 0.0
        %v677 = vmax.f32 %v661, 0.0
        %v678 = vmax.f32 %v662, 0.0
        %v679 = vmax.f32 %v663, 0.0
        %v680 = vmax.f32 %v664, 0.0
        %v681 = vmax.f32 %v665, 0.0
        %v682 = vmax.f32 %v666, 0.0
        %v683 = vmax.f32 %v667, 0.0
        %v684 = vmax.f32 %v668, 0.0
        %v685 = vld [vmem:[%s5] ss:$8 sm:$0x7]
        %s686 = scalar_lea.vmem %s5, 1
        %v687 = vld [vmem:[%s686] ss:$8 sm:$0x7]
        %s688 = scalar_lea.vmem %s5, 2
        %v689 = vld [vmem:[%s688] ss:$8 sm:$0x7]
        %v690 = vpack.c.bf16 %v673, %v669
        %v691 = vpack.c.bf16 %v674, %v670
        %v692 = vpack.c.bf16 %v675, %v671
        %v693 = vpack.c.bf16 %v676, %v672
        %v694 = vpack.c.bf16 %v681, %v677
        %v695 = vpack.c.bf16 %v682, %v678
        %v696 = vpack.c.bf16 %v683, %v679
        %v697 = vpack.c.bf16 %v684, %v680
        %v698 = vld [vmem:[#allocation2] sm:$0xff]
        %v699 = vld [vmem:[#allocation2 + $0x8] sm:$0xf]
        %v700 = vld [vmem:[#allocation2 + $0xc] sm:$0xff]
        %v701 = vld [vmem:[#allocation2 + $0x14] sm:$0xf]
        %v702 = vld [vmem:[#allocation2 + $0x18] sm:$0xff]
        %v703 = vld [vmem:[#allocation2 + $0x20] sm:$0xf]
        %v704 = vld [vmem:[#allocation2 + $0x24] sm:$0xff]
        %v705 = vld [vmem:[#allocation2 + $0x2c] sm:$0xf]
        %v706 = vld [vmem:[#allocation2 + $0x30] sm:$0xff]
        %v707 = vld [vmem:[#allocation2 + $0x38] sm:$0xf]
        %v708 = vld [vmem:[#allocation2 + $0x3c] sm:$0xff]
        %v709 = vld [vmem:[#allocation2 + $0x44] sm:$0xf]
        %v710 = vld [vmem:[#allocation2 + $0x48] sm:$0xff]
        %v711 = vld [vmem:[#allocation2 + $0x50] sm:$0xf]
        %v712 = vld [vmem:[#allocation2 + $0x54] sm:$0xff]
        %v713 = vld [vmem:[#allocation2 + $0x5c] sm:$0xf]
        %v714 = vld [vmem:[#allocation2 + $0x60] sm:$0xff]
        %v715 = vld [vmem:[#allocation2 + $0x68] sm:$0xf]
        %v716 = vld [vmem:[#allocation2 + $0x6c] sm:$0xff]
        %v717 = vld [vmem:[#allocation2 + $0x74] sm:$0xf]
        %v718 = vld [vmem:[#allocation2 + $0x78] sm:$0xff]
        %v719 = vld [vmem:[#allocation2 + $0x80] sm:$0xf]
        %v720 = vld [vmem:[#allocation2 + $0x84] sm:$0xff]
        %v721 = vld [vmem:[#allocation2 + $0x8c] sm:$0xf]
        %v722 = vld [vmem:[#allocation2 + $0x90] sm:$0xff]
        %v723 = vld [vmem:[#allocation2 + $0x98] sm:$0xf]
        %v724 = vld [vmem:[#allocation2 + $0x9c] sm:$0xff]
        %v725 = vld [vmem:[#allocation2 + $0xa4] sm:$0xf]
        %v726 = vld [vmem:[#allocation2 + $0xa8] sm:$0xff]
        %v727 = vld [vmem:[#allocation2 + $0xb0] sm:$0xf]
        %v728 = vld [vmem:[#allocation2 + $0xb4] sm:$0xff]
        %v729 = vld [vmem:[#allocation2 + $0xbc] sm:$0xf]
        %v730 = vld [vmem:[#allocation2 + $0xc0] sm:$0xff]
        %v731 = vld [vmem:[#allocation2 + $0xc8] sm:$0xf]
        %v732 = vld [vmem:[#allocation2 + $0xcc] sm:$0xff]
        %v733 = vld [vmem:[#allocation2 + $0xd4] sm:$0xf]
        %v734 = vld [vmem:[#allocation2 + $0xd8] sm:$0xff]
        %v735 = vld [vmem:[#allocation2 + $0xe0] sm:$0xf]
        %v736 = vld [vmem:[#allocation2 + $0xe4] sm:$0xff]
        %v737 = vld [vmem:[#allocation2 + $0xec] sm:$0xf]
        %v738 = vld [vmem:[#allocation2 + $0xf0] sm:$0xff]
        %v739 = vld [vmem:[#allocation2 + $0xf8] sm:$0xf]
        %v740 = vld [vmem:[#allocation2 + $0xfc] sm:$0xff]
        %v741 = vld [vmem:[#allocation2 + $0x104] sm:$0xf]
        %v742 = vld [vmem:[#allocation2 + $0x108] sm:$0xff]
        %v743 = vld [vmem:[#allocation2 + $0x110] sm:$0xf]
        %v744 = vld [vmem:[#allocation2 + $0x114] sm:$0xff]
        %v745 = vld [vmem:[#allocation2 + $0x11c] sm:$0xf]
        %v746 = vld [vmem:[#allocation2 + $0x120] sm:$0xff]
        %v747 = vld [vmem:[#allocation2 + $0x128] sm:$0xf]
        %v748 = vld [vmem:[#allocation2 + $0x12c] sm:$0xff]
        %v749 = vld [vmem:[#allocation2 + $0x134] sm:$0xf]
        %v750 = vld [vmem:[#allocation2 + $0x138] sm:$0xff]
        %v751 = vld [vmem:[#allocation2 + $0x140] sm:$0xf]
        %v752 = vld [vmem:[#allocation2 + $0x144] sm:$0xff]
        %v753 = vld [vmem:[#allocation2 + $0x14c] sm:$0xf]
        %v754 = vld [vmem:[#allocation2 + $0x150] sm:$0xff]
        %v755 = vld [vmem:[#allocation2 + $0x158] sm:$0xf]
        %v756 = vld [vmem:[#allocation2 + $0x15c] sm:$0xff]
        %v757 = vld [vmem:[#allocation2 + $0x164] sm:$0xf]
        %v758 = vld [vmem:[#allocation2 + $0x168] sm:$0xff]
        %v759 = vld [vmem:[#allocation2 + $0x170] sm:$0xf]
        %v760 = vld [vmem:[#allocation2 + $0x174] sm:$0xff]
        %v761 = vld [vmem:[#allocation2 + $0x17c] sm:$0xf]
        %v762 = vld [vmem:[#allocation2 + $0x180] sm:$0xff]
        %v763 = vld [vmem:[#allocation2 + $0x188] sm:$0xf]
        %v764 = vld [vmem:[#allocation2 + $0x18c] sm:$0xff]
        %v765 = vld [vmem:[#allocation2 + $0x194] sm:$0xf]
        %v766 = vld [vmem:[#allocation2 + $0x198] sm:$0xff]
        %v767 = vld [vmem:[#allocation2 + $0x1a0] sm:$0xf]
        %v768 = vld [vmem:[#allocation2 + $0x1a4] sm:$0xff]
        %v769 = vld [vmem:[#allocation2 + $0x1ac] sm:$0xf]
        %v770 = vld [vmem:[#allocation2 + $0x1b0] sm:$0xff]
        %v771 = vld [vmem:[#allocation2 + $0x1b8] sm:$0xf]
        %v772 = vld [vmem:[#allocation2 + $0x1bc] sm:$0xff]
        %v773 = vld [vmem:[#allocation2 + $0x1c4] sm:$0xf]
        %v774 = vld [vmem:[#allocation2 + $0x1c8] sm:$0xff]
        %v775 = vld [vmem:[#allocation2 + $0x1d0] sm:$0xf]
        %v776 = vld [vmem:[#allocation2 + $0x1d4] sm:$0xff]
        %v777 = vld [vmem:[#allocation2 + $0x1dc] sm:$0xf]
        %v778 = vld [vmem:[#allocation2 + $0x1e0] sm:$0xff]
        %v779 = vld [vmem:[#allocation2 + $0x1e8] sm:$0xf]
        %v780 = vld [vmem:[#allocation2 + $0x1ec] sm:$0xff]
        %v781 = vld [vmem:[#allocation2 + $0x1f4] sm:$0xf]
        %v782 = vld [vmem:[#allocation2 + $0x1f8] sm:$0xff]
        %v783 = vld [vmem:[#allocation2 + $0x200] sm:$0xf]
        %v784 = vld [vmem:[#allocation2 + $0x204] sm:$0xff]
        %v785 = vld [vmem:[#allocation2 + $0x20c] sm:$0xf]
        %v786 = vld [vmem:[#allocation2 + $0x210] sm:$0xff]
        %v787 = vld [vmem:[#allocation2 + $0x218] sm:$0xf]
        %v788 = vld [vmem:[#allocation2 + $0x21c] sm:$0xff]
        %v789 = vld [vmem:[#allocation2 + $0x224] sm:$0xf]
        %v790 = vld [vmem:[#allocation2 + $0x228] sm:$0xff]
        %v791 = vld [vmem:[#allocation2 + $0x230] sm:$0xf]
        %v792 = vld [vmem:[#allocation2 + $0x234] sm:$0xff]
        %v793 = vld [vmem:[#allocation2 + $0x23c] sm:$0xf]
        %v794 = vld [vmem:[#allocation2 + $0x240] sm:$0xff]
        %v795 = vld [vmem:[#allocation2 + $0x248] sm:$0xf]
        %v796 = vld [vmem:[#allocation2 + $0x24c] sm:$0xff]
        %v797 = vld [vmem:[#allocation2 + $0x254] sm:$0xf]
        %v798 = vld [vmem:[#allocation2 + $0x258] sm:$0xff]
        %v799 = vld [vmem:[#allocation2 + $0x260] sm:$0xf]
        %v800 = vld [vmem:[#allocation2 + $0x264] sm:$0xff]
        %v801 = vld [vmem:[#allocation2 + $0x26c] sm:$0xf]
        %v802 = vld [vmem:[#allocation2 + $0x270] sm:$0xff]
        %v803 = vld [vmem:[#allocation2 + $0x278] sm:$0xf]
        %v804 = vld [vmem:[#allocation2 + $0x27c] sm:$0xff]
        %v805 = vld [vmem:[#allocation2 + $0x284] sm:$0xf]
        %v806 = vld [vmem:[#allocation2 + $0x288] sm:$0xff]
        %v807 = vld [vmem:[#allocation2 + $0x290] sm:$0xf]
        %v808 = vld [vmem:[#allocation2 + $0x294] sm:$0xff]
        %v809 = vld [vmem:[#allocation2 + $0x29c] sm:$0xf]
        %v810 = vld [vmem:[#allocation2 + $0x2a0] sm:$0xff]
        %v811 = vld [vmem:[#allocation2 + $0x2a8] sm:$0xf]
        %v812 = vld [vmem:[#allocation2 + $0x2ac] sm:$0xff]
        %v813 = vld [vmem:[#allocation2 + $0x2b4] sm:$0xf]
        %v814 = vld [vmem:[#allocation2 + $0x2b8] sm:$0xff]
        %v815 = vld [vmem:[#allocation2 + $0x2c0] sm:$0xf]
        %v816 = vld [vmem:[#allocation2 + $0x2c4] sm:$0xff]
        %v817 = vld [vmem:[#allocation2 + $0x2cc] sm:$0xf]
        %v818 = vld [vmem:[#allocation2 + $0x2d0] sm:$0xff]
        %v819 = vld [vmem:[#allocation2 + $0x2d8] sm:$0xf]
        %v820 = vld [vmem:[#allocation2 + $0x2dc] sm:$0xff]
        %v821 = vld [vmem:[#allocation2 + $0x2e4] sm:$0xf]
        %v822 = vld [vmem:[#allocation2 + $0x2e8] sm:$0xff]
        %v823 = vld [vmem:[#allocation2 + $0x2f0] sm:$0xf]
        %v824 = vld [vmem:[#allocation2 + $0x2f4] sm:$0xff]
        %v825 = vld [vmem:[#allocation2 + $0x2fc] sm:$0xf]
        %v827 = vlaneseq
        %v828 = vshrl.u32 %v827, 7
        %v829 = vsub.s32 0, %v828
        %v830 = vrot.slane %v685, %v829
        %v831 = vlaneseq
        %v832 = vshrl.u32 %v831, 7
        %v833 = vsub.s32 1, %v832
        %v834 = vrot.slane %v685, %v833
        %v835 = vlaneseq
        %v836 = vshrl.u32 %v835, 7
        %v837 = vsub.s32 2, %v836
        %v838 = vrot.slane %v685, %v837
        %v970 = vunpack.c.l.b16 %v698
        %v971 = vunpack.c.h.b16 %v698
        %v972 = vunpack.c.l.b16 %v699
        %v973 = vunpack.c.l.b16 %v700
        %v974 = vunpack.c.h.b16 %v700
        %v975 = vunpack.c.l.b16 %v701
        %v976 = vunpack.c.l.b16 %v702
        %v977 = vunpack.c.h.b16 %v702
        %v978 = vunpack.c.l.b16 %v703
        %v979 = vunpack.c.l.b16 %v704
        %v980 = vunpack.c.h.b16 %v704
        %v981 = vunpack.c.l.b16 %v705
        %v982 = vunpack.c.l.b16 %v706
        %v983 = vunpack.c.h.b16 %v706
        %v984 = vunpack.c.l.b16 %v707
        %v985 = vunpack.c.l.b16 %v708
        %v986 = vunpack.c.h.b16 %v708
        %v987 = vunpack.c.l.b16 %v709
        %v988 = vunpack.c.l.b16 %v710
        %v989 = vunpack.c.h.b16 %v710
        %v990 = vunpack.c.l.b16 %v711
        %v991 = vunpack.c.l.b16 %v712
        %v992 = vunpack.c.h.b16 %v712
        %v993 = vunpack.c.l.b16 %v713
        %v994 = vunpack.c.l.b16 %v714
        %v995 = vunpack.c.h.b16 %v714
        %v996 = vunpack.c.l.b16 %v715
        %v997 = vunpack.c.l.b16 %v716
        %v998 = vunpack.c.h.b16 %v716
        %v999 = vunpack.c.l.b16 %v717
        %v1000 = vunpack.c.l.b16 %v718
        %v1001 = vunpack.c.h.b16 %v718
        %v1002 = vunpack.c.l.b16 %v719
        %v1003 = vunpack.c.l.b16 %v720
        %v1004 = vunpack.c.h.b16 %v720
        %v1005 = vunpack.c.l.b16 %v721
        %v1006 = vunpack.c.l.b16 %v722
        %v1007 = vunpack.c.h.b16 %v722
        %v1008 = vunpack.c.l.b16 %v723
        %v1009 = vunpack.c.l.b16 %v724
        %v1010 = vunpack.c.h.b16 %v724
        %v1011 = vunpack.c.l.b16 %v725
        %v1012 = vunpack.c.l.b16 %v726
        %v1013 = vunpack.c.h.b16 %v726
        %v1014 = vunpack.c.l.b16 %v727
        %v1015 = vunpack.c.l.b16 %v728
        %v1016 = vunpack.c.h.b16 %v728
        %v1017 = vunpack.c.l.b16 %v729
        %v1018 = vunpack.c.l.b16 %v730
        %v1019 = vunpack.c.h.b16 %v730
        %v1020 = vunpack.c.l.b16 %v731
        %v1021 = vunpack.c.l.b16 %v732
        %v1022 = vunpack.c.h.b16 %v732
        %v1023 = vunpack.c.l.b16 %v733
        %v1024 = vunpack.c.l.b16 %v734
        %v1025 = vunpack.c.h.b16 %v734
        %v1026 = vunpack.c.l.b16 %v735
        %v1027 = vunpack.c.l.b16 %v736
        %v1028 = vunpack.c.h.b16 %v736
        %v1029 = vunpack.c.l.b16 %v737
        %v1030 = vunpack.c.l.b16 %v738
        %v1031 = vunpack.c.h.b16 %v738
        %v1032 = vunpack.c.l.b16 %v739
        %v1033 = vunpack.c.l.b16 %v740
        %v1034 = vunpack.c.h.b16 %v740
        %v1035 = vunpack.c.l.b16 %v741
        %v1036 = vunpack.c.l.b16 %v742
        %v1037 = vunpack.c.h.b16 %v742
        %v1038 = vunpack.c.l.b16 %v743
        %v1039 = vunpack.c.l.b16 %v744
        %v1040 = vunpack.c.h.b16 %v744
        %v1041 = vunpack.c.l.b16 %v745
        %v1042 = vunpack.c.l.b16 %v746
        %v1043 = vunpack.c.h.b16 %v746
        %v1044 = vunpack.c.l.b16 %v747
        %v1045 = vunpack.c.l.b16 %v748
        %v1046 = vunpack.c.h.b16 %v748
        %v1047 = vunpack.c.l.b16 %v749
        %v1048 = vunpack.c.l.b16 %v750
        %v1049 = vunpack.c.h.b16 %v750
        %v1050 = vunpack.c.l.b16 %v751
        %v1051 = vunpack.c.l.b16 %v752
        %v1052 = vunpack.c.h.b16 %v752
        %v1053 = vunpack.c.l.b16 %v753
        %v1054 = vunpack.c.l.b16 %v754
        %v1055 = vunpack.c.h.b16 %v754
        %v1056 = vunpack.c.l.b16 %v755
        %v1057 = vunpack.c.l.b16 %v756
        %v1058 = vunpack.c.h.b16 %v756
        %v1059 = vunpack.c.l.b16 %v757
        %v1060 = vunpack.c.l.b16 %v758
        %v1061 = vunpack.c.h.b16 %v758
        %v1062 = vunpack.c.l.b16 %v759
        %v1063 = vunpack.c.l.b16 %v760
        %v1064 = vunpack.c.h.b16 %v760
        %v1065 = vunpack.c.l.b16 %v761
        %v1066 = vunpack.c.l.b16 %v762
        %v1067 = vunpack.c.h.b16 %v762
        %v1068 = vunpack.c.l.b16 %v763
        %v1069 = vunpack.c.l.b16 %v764
        %v1070 = vunpack.c.h.b16 %v764
        %v1071 = vunpack.c.l.b16 %v765
        %v1072 = vunpack.c.l.b16 %v766
        %v1073 = vunpack.c.h.b16 %v766
        %v1074 = vunpack.c.l.b16 %v767
        %v1075 = vunpack.c.l.b16 %v768
        %v1076 = vunpack.c.h.b16 %v768
        %v1077 = vunpack.c.l.b16 %v769
        %v1078 = vunpack.c.l.b16 %v770
        %v1079 = vunpack.c.h.b16 %v770
        %v1080 = vunpack.c.l.b16 %v771
        %v1081 = vunpack.c.l.b16 %v772
        %v1082 = vunpack.c.h.b16 %v772
        %v1083 = vunpack.c.l.b16 %v773
        %v1084 = vunpack.c.l.b16 %v774
        %v1085 = vunpack.c.h.b16 %v774
        %v1086 = vunpack.c.l.b16 %v775
        %v1087 = vunpack.c.l.b16 %v776
        %v1088 = vunpack.c.h.b16 %v776
        %v1089 = vunpack.c.l.b16 %v777
        %v1090 = vunpack.c.l.b16 %v778
        %v1091 = vunpack.c.h.b16 %v778
        %v1092 = vunpack.c.l.b16 %v779
        %v1093 = vunpack.c.l.b16 %v780
        %v1094 = vunpack.c.h.b16 %v780
        %v1095 = vunpack.c.l.b16 %v781
        %v1096 = vunpack.c.l.b16 %v782
        %v1097 = vunpack.c.h.b16 %v782
        %v1098 = vunpack.c.l.b16 %v783
        %v1099 = vunpack.c.l.b16 %v784
        %v1100 = vunpack.c.h.b16 %v784
        %v1101 = vunpack.c.l.b16 %v785
        %v1102 = vunpack.c.l.b16 %v786
        %v1103 = vunpack.c.h.b16 %v786
        %v1104 = vunpack.c.l.b16 %v787
        %v1105 = vunpack.c.l.b16 %v788
        %v1106 = vunpack.c.h.b16 %v788
        %v1107 = vunpack.c.l.b16 %v789
        %v1108 = vunpack.c.l.b16 %v790
        %v1109 = vunpack.c.h.b16 %v790
        %v1110 = vunpack.c.l.b16 %v791
        %v1111 = vunpack.c.l.b16 %v792
        %v1112 = vunpack.c.h.b16 %v792
        %v1113 = vunpack.c.l.b16 %v793
        %v1114 = vunpack.c.l.b16 %v794
        %v1115 = vunpack.c.h.b16 %v794
        %v1116 = vunpack.c.l.b16 %v795
        %v1117 = vunpack.c.l.b16 %v796
        %v1118 = vunpack.c.h.b16 %v796
        %v1119 = vunpack.c.l.b16 %v797
        %v1120 = vunpack.c.l.b16 %v798
        %v1121 = vunpack.c.h.b16 %v798
        %v1122 = vunpack.c.l.b16 %v799
        %v1123 = vunpack.c.l.b16 %v800
        %v1124 = vunpack.c.h.b16 %v800
        %v1125 = vunpack.c.l.b16 %v801
        %v1126 = vunpack.c.l.b16 %v802
        %v1127 = vunpack.c.h.b16 %v802
        %v1128 = vunpack.c.l.b16 %v803
        %v1129 = vunpack.c.l.b16 %v804
        %v1130 = vunpack.c.h.b16 %v804
        %v1131 = vunpack.c.l.b16 %v805
        %v1132 = vunpack.c.l.b16 %v806
        %v1133 = vunpack.c.h.b16 %v806
        %v1134 = vunpack.c.l.b16 %v807
        %v1135 = vunpack.c.l.b16 %v808
        %v1136 = vunpack.c.h.b16 %v808
        %v1137 = vunpack.c.l.b16 %v809
        %v1138 = vunpack.c.l.b16 %v810
        %v1139 = vunpack.c.h.b16 %v810
        %v1140 = vunpack.c.l.b16 %v811
        %v1141 = vunpack.c.l.b16 %v812
        %v1142 = vunpack.c.h.b16 %v812
        %v1143 = vunpack.c.l.b16 %v813
        %v1144 = vunpack.c.l.b16 %v814
        %v1145 = vunpack.c.h.b16 %v814
        %v1146 = vunpack.c.l.b16 %v815
        %v1147 = vunpack.c.l.b16 %v816
        %v1148 = vunpack.c.h.b16 %v816
        %v1149 = vunpack.c.l.b16 %v817
        %v1150 = vunpack.c.l.b16 %v818
        %v1151 = vunpack.c.h.b16 %v818
        %v1152 = vunpack.c.l.b16 %v819
        %v1153 = vunpack.c.l.b16 %v820
        %v1154 = vunpack.c.h.b16 %v820
        %v1155 = vunpack.c.l.b16 %v821
        %v1156 = vunpack.c.l.b16 %v822
        %v1157 = vunpack.c.h.b16 %v822
        %v1158 = vunpack.c.l.b16 %v823
        %v1159 = vunpack.c.l.b16 %v824
        %v1160 = vunpack.c.h.b16 %v824
        %v1161 = vunpack.c.l.b16 %v825
        %v1162 = vpack.c.b16 %v973, %v970
        %v1163 = vpack.c.b16 %v974, %v971
        %v1164 = vpack.c.b16 %v975, %v972
        %v1165 = vpack.c.b16 %v979, %v976
        %v1166 = vpack.c.b16 %v980, %v977
        %v1167 = vpack.c.b16 %v981, %v978
        %v1168 = vpack.c.b16 %v985, %v982
        %v1169 = vpack.c.b16 %v986, %v983
        %v1170 = vpack.c.b16 %v987, %v984
        %v1171 = vpack.c.b16 %v991, %v988
        %v1172 = vpack.c.b16 %v992, %v989
        %v1173 = vpack.c.b16 %v993, %v990
        %v1174 = vpack.c.b16 %v997, %v994
        %v1175 = vpack.c.b16 %v998, %v995
        %v1176 = vpack.c.b16 %v999, %v996
        %v1177 = vpack.c.b16 %v1003, %v1000
        %v1178 = vpack.c.b16 %v1004, %v1001
        %v1179 = vpack.c.b16 %v1005, %v1002
        %v1180 = vpack.c.b16 %v1009, %v1006
        %v1181 = vpack.c.b16 %v1010, %v1007
        %v1182 = vpack.c.b16 %v1011, %v1008
        %v1183 = vpack.c.b16 %v1015, %v1012
        %v1184 = vpack.c.b16 %v1016, %v1013
        %v1185 = vpack.c.b16 %v1017, %v1014
        %v1186 = vpack.c.b16 %v1021, %v1018
        %v1187 = vpack.c.b16 %v1022, %v1019
        %v1188 = vpack.c.b16 %v1023, %v1020
        %v1189 = vpack.c.b16 %v1027, %v1024
        %v1190 = vpack.c.b16 %v1028, %v1025
        %v1191 = vpack.c.b16 %v1029, %v1026
        %v1192 = vpack.c.b16 %v1033, %v1030
        %v1193 = vpack.c.b16 %v1034, %v1031
        %v1194 = vpack.c.b16 %v1035, %v1032
        %v1195 = vpack.c.b16 %v1039, %v1036
        %v1196 = vpack.c.b16 %v1040, %v1037
        %v1197 = vpack.c.b16 %v1041, %v1038
        %v1198 = vpack.c.b16 %v1045, %v1042
        %v1199 = vpack.c.b16 %v1046, %v1043
        %v1200 = vpack.c.b16 %v1047, %v1044
        %v1201 = vpack.c.b16 %v1051, %v1048
        %v1202 = vpack.c.b16 %v1052, %v1049
        %v1203 = vpack.c.b16 %v1053, %v1050
        %v1204 = vpack.c.b16 %v1057, %v1054
        %v1205 = vpack.c.b16 %v1058, %v1055
        %v1206 = vpack.c.b16 %v1059, %v1056
        %v1207 = vpack.c.b16 %v1063, %v1060
        %v1208 = vpack.c.b16 %v1064, %v1061
        %v1209 = vpack.c.b16 %v1065, %v1062
        %v1210 = vpack.c.b16 %v1069, %v1066
        %v1211 = vpack.c.b16 %v1070, %v1067
        %v1212 = vpack.c.b16 %v1071, %v1068
        %v1213 = vpack.c.b16 %v1075, %v1072
        %v1214 = vpack.c.b16 %v1076, %v1073
        %v1215 = vpack.c.b16 %v1077, %v1074
        %v1216 = vpack.c.b16 %v1081, %v1078
        %v1217 = vpack.c.b16 %v1082, %v1079
        %v1218 = vpack.c.b16 %v1083, %v1080
        %v1219 = vpack.c.b16 %v1087, %v1084
        %v1220 = vpack.c.b16 %v1088, %v1085
        %v1221 = vpack.c.b16 %v1089, %v1086
        %v1222 = vpack.c.b16 %v1093, %v1090
        %v1223 = vpack.c.b16 %v1094, %v1091
        %v1224 = vpack.c.b16 %v1095, %v1092
        %v1225 = vpack.c.b16 %v1099, %v1096
        %v1226 = vpack.c.b16 %v1100, %v1097
        %v1227 = vpack.c.b16 %v1101, %v1098
        %v1228 = vpack.c.b16 %v1105, %v1102
        %v1229 = vpack.c.b16 %v1106, %v1103
        %v1230 = vpack.c.b16 %v1107, %v1104
        %v1231 = vpack.c.b16 %v1111, %v1108
        %v1232 = vpack.c.b16 %v1112, %v1109
        %v1233 = vpack.c.b16 %v1113, %v1110
        %v1234 = vpack.c.b16 %v1117, %v1114
        %v1235 = vpack.c.b16 %v1118, %v1115
        %v1236 = vpack.c.b16 %v1119, %v1116
        %v1237 = vpack.c.b16 %v1123, %v1120
        %v1238 = vpack.c.b16 %v1124, %v1121
        %v1239 = vpack.c.b16 %v1125, %v1122
        %v1240 = vpack.c.b16 %v1129, %v1126
        %v1241 = vpack.c.b16 %v1130, %v1127
        %v1242 = vpack.c.b16 %v1131, %v1128
        %v1243 = vpack.c.b16 %v1135, %v1132
        %v1244 = vpack.c.b16 %v1136, %v1133
        %v1245 = vpack.c.b16 %v1137, %v1134
        %v1246 = vpack.c.b16 %v1141, %v1138
        %v1247 = vpack.c.b16 %v1142, %v1139
        %v1248 = vpack.c.b16 %v1143, %v1140
        %v1249 = vpack.c.b16 %v1147, %v1144
        %v1250 = vpack.c.b16 %v1148, %v1145
        %v1251 = vpack.c.b16 %v1149, %v1146
        %v1252 = vpack.c.b16 %v1153, %v1150
        %v1253 = vpack.c.b16 %v1154, %v1151
        %v1254 = vpack.c.b16 %v1155, %v1152
        %v1255 = vpack.c.b16 %v1159, %v1156
        %v1256 = vpack.c.b16 %v1160, %v1157
        %v1257 = vpack.c.b16 %v1161, %v1158
        %1354 = vmatprep.subr.bf16.mxu0 %v1163
        %1355 = vmatpush1.bf16.msra.mxu0 %v1162
        %1356 = vmatprep.subr.bf16.mxu0 %v1166
        %1357 = vmatpush1.bf16.msra.mxu0 %v1165
        %1358 = vmatprep.subr.bf16.mxu0 %v1169
        %1359 = vmatpush1.bf16.msra.mxu0 %v1168
        %1360 = vmatprep.subr.bf16.mxu0 %v1172
        %1361 = vmatpush1.bf16.msra.mxu0 %v1171
        %1362 = vmatprep.subr.bf16.mxu0 %v1175
        %1363 = vmatpush1.bf16.msra.mxu0 %v1174
        %1364 = vmatprep.subr.bf16.mxu0 %v1178
        %1365 = vmatpush1.bf16.msra.mxu0 %v1177
        %1366 = vmatprep.subr.bf16.mxu0 %v1181
        %1367 = vmatpush1.bf16.msra.mxu0 %v1180
        %1368 = vmatprep.subr.bf16.mxu0 %v1184
        %1369 = vmatpush1.bf16.msra.mxu0 %v1183
        %1370 = vmatprep.subr.bf16.mxu0 %v1187
        %1371 = vmatpush1.bf16.msra.mxu0 %v1186
        %1372 = vmatprep.subr.bf16.mxu0 %v1190
        %1373 = vmatpush1.bf16.msra.mxu0 %v1189
        %1374 = vmatprep.subr.bf16.mxu0 %v1193
        %1375 = vmatpush1.bf16.msra.mxu0 %v1192
        %1376 = vmatprep.subr.bf16.mxu0 %v1196
        %1377 = vmatpush1.bf16.msra.mxu0 %v1195
        %1378 = vmatprep.subr.bf16.mxu0 %v1199
        %1379 = vmatpush1.bf16.msra.mxu0 %v1198
        %1380 = vmatprep.subr.bf16.mxu0 %v1202
        %1381 = vmatpush1.bf16.msra.mxu0 %v1201
        %1382 = vmatprep.subr.bf16.mxu0 %v1205
        %1383 = vmatpush1.bf16.msra.mxu0 %v1204
        %1384 = vmatprep.subr.bf16.mxu0 %v1208
        %1385 = vmatpush1.bf16.msra.mxu0 %v1207
        %1386 = vmatprep.mubr.bf16.mxu0 %v691
        %1387 = vmatmul.mubr.bf16.gmra.mrb[0].mxu0 %v690
        %v1388 = vpop.f32.mrb[0].mxu0
        %v1389 = vadd.f32 %v830, %v1388
        %v1390 = vpop.f32.mrb[0].mxu0
        %v1391 = vadd.f32 %v834, %v1390
        %v1392 = vpop.f32.mrb[0].mxu0
        %v1393 = vadd.f32 %v830, %v1392
        %v1394 = vpop.f32.mrb[0].mxu0
        %v1395 = vadd.f32 %v834, %v1394
        %1396 = vmatprep.mubr.bf16.mxu0 %v695
        %1397 = vmatmul.mubr.bf16.gmra.mrb[0].mxu0 %v694
        %v1398 = vpop.f32.mrb[0].mxu0
        %v1399 = vadd.f32 %v830, %v1398
        %v1400 = vpop.f32.mrb[0].mxu0
        %v1401 = vadd.f32 %v834, %v1400
        %v1402 = vpop.f32.mrb[0].mxu0
        %v1403 = vadd.f32 %v830, %v1402
        %v1404 = vpop.f32.mrb[0].mxu0
        %v1405 = vadd.f32 %v834, %v1404
        %1406 = vdwg.mxu0
        %1407 = vmatprep.subr.bf16.mxu0 %v1211
        %1408 = vmatpush1.bf16.msra.mxu0 %v1210
        %1409 = vmatprep.subr.bf16.mxu0 %v1214
        %1410 = vmatpush1.bf16.msra.mxu0 %v1213
        %1411 = vmatprep.subr.bf16.mxu0 %v1217
        %1412 = vmatpush1.bf16.msra.mxu0 %v1216
        %1413 = vmatprep.subr.bf16.mxu0 %v1220
        %1414 = vmatpush1.bf16.msra.mxu0 %v1219
        %1415 = vmatprep.subr.bf16.mxu0 %v1223
        %1416 = vmatpush1.bf16.msra.mxu0 %v1222
        %1417 = vmatprep.subr.bf16.mxu0 %v1226
        %1418 = vmatpush1.bf16.msra.mxu0 %v1225
        %1419 = vmatprep.subr.bf16.mxu0 %v1229
        %1420 = vmatpush1.bf16.msra.mxu0 %v1228
        %1421 = vmatprep.subr.bf16.mxu0 %v1232
        %1422 = vmatpush1.bf16.msra.mxu0 %v1231
        %1423 = vmatprep.subr.bf16.mxu0 %v1235
        %1424 = vmatpush1.bf16.msra.mxu0 %v1234
        %1425 = vmatprep.subr.bf16.mxu0 %v1238
        %1426 = vmatpush1.bf16.msra.mxu0 %v1237
        %1427 = vmatprep.subr.bf16.mxu0 %v1241
        %1428 = vmatpush1.bf16.msra.mxu0 %v1240
        %1429 = vmatprep.subr.bf16.mxu0 %v1244
        %1430 = vmatpush1.bf16.msra.mxu0 %v1243
        %1431 = vmatprep.subr.bf16.mxu0 %v1247
        %1432 = vmatpush1.bf16.msra.mxu0 %v1246
        %1433 = vmatprep.subr.bf16.mxu0 %v1250
        %1434 = vmatpush1.bf16.msra.mxu0 %v1249
        %1435 = vmatprep.subr.bf16.mxu0 %v1253
        %1436 = vmatpush1.bf16.msra.mxu0 %v1252
        %1437 = vmatprep.subr.bf16.mxu0 %v1256
        %1438 = vmatpush1.bf16.msra.mxu0 %v1255
        %1439 = vmatprep.mubr.bf16.mxu0 %v693
        %1440 = vmatmul.mubr.bf16.gmra.mrb[0].mxu0 %v692
        %v1441 = vpop.f32.mrb[0].mxu0
        %v1442 = vadd.f32 %v1389, %v1441
        %v1443 = vpop.f32.mrb[0].mxu0
        %v1444 = vadd.f32 %v1391, %v1443
        %v1445 = vpop.f32.mrb[0].mxu0
        %v1446 = vadd.f32 %v1393, %v1445
        %v1447 = vpop.f32.mrb[0].mxu0
        %v1448 = vadd.f32 %v1395, %v1447
        %1449 = vmatprep.mubr.bf16.mxu0 %v697
        %1450 = vmatmul.mubr.bf16.gmra.mrb[0].mxu0 %v696
        %v1451 = vpop.f32.mrb[0].mxu0
        %v1452 = vadd.f32 %v1399, %v1451
        %v1453 = vpop.f32.mrb[0].mxu0
        %v1454 = vadd.f32 %v1401, %v1453
        %v1455 = vpop.f32.mrb[0].mxu0
        %v1456 = vadd.f32 %v1403, %v1455
        %v1457 = vpop.f32.mrb[0].mxu0
        %v1458 = vadd.f32 %v1405, %v1457
        %1459 = vdwg.mxu0
        %1460 = vmatprep.subr.bf16.mxu0 0
        %1461 = vmatpush1.bf16.msra.mxu0 %v1164
        %1462 = vmatprep.subr.bf16.mxu0 0
        %1463 = vmatpush1.bf16.msra.mxu0 %v1167
        %1464 = vmatprep.subr.bf16.mxu0 0
        %1465 = vmatpush1.bf16.msra.mxu0 %v1170
        %1466 = vmatprep.subr.bf16.mxu0 0
        %1467 = vmatpush1.bf16.msra.mxu0 %v1173
        %1468 = vmatprep.subr.bf16.mxu0 0
        %1469 = vmatpush1.bf16.msra.mxu0 %v1176
        %1470 = vmatprep.subr.bf16.mxu0 0
        %1471 = vmatpush1.bf16.msra.mxu0 %v1179
        %1472 = vmatprep.subr.bf16.mxu0 0
        %1473 = vmatpush1.bf16.msra.mxu0 %v1182
        %1474 = vmatprep.subr.bf16.mxu0 0
        %1475 = vmatpush1.bf16.msra.mxu0 %v1185
        %1476 = vmatprep.subr.bf16.mxu0 0
        %1477 = vmatpush1.bf16.msra.mxu0 %v1188
        %1478 = vmatprep.subr.bf16.mxu0 0
        %1479 = vmatpush1.bf16.msra.mxu0 %v1191
        %1480 = vmatprep.subr.bf16.mxu0 0
        %1481 = vmatpush1.bf16.msra.mxu0 %v1194
        %1482 = vmatprep.subr.bf16.mxu0 0
        %1483 = vmatpush1.bf16.msra.mxu0 %v1197
        %1484 = vmatprep.subr.bf16.mxu0 0
        %1485 = vmatpush1.bf16.msra.mxu0 %v1200
        %1486 = vmatprep.subr.bf16.mxu0 0
        %1487 = vmatpush1.bf16.msra.mxu0 %v1203
        %1488 = vmatprep.subr.bf16.mxu0 0
        %1489 = vmatpush1.bf16.msra.mxu0 %v1206
        %1490 = vmatprep.subr.bf16.mxu0 0
        %1491 = vmatpush1.bf16.msra.mxu0 %v1209
        %1492 = vmatprep.mubr.bf16.mxu0 %v691
        %1493 = vmatmul.mubr.bf16.gmra.mrb[0].mxu0 %v690
        %v1494 = vpop.f32.mrb[0].mxu0
        %v1495 = vadd.f32 %v838, %v1494
        %v1496 = vpop.f32.mrb[0].mxu0
        %v1497 = vpop.f32.mrb[0].mxu0
        %v1498 = vadd.f32 %v838, %v1497
        %v1499 = vpop.f32.mrb[0].mxu0
        %1500 = vmatprep.mubr.bf16.mxu0 %v695
        %1501 = vmatmul.mubr.bf16.gmra.mrb[0].mxu0 %v694
        %v1502 = vpop.f32.mrb[0].mxu0
        %v1503 = vadd.f32 %v838, %v1502
        %v1504 = vpop.f32.mrb[0].mxu0
        %v1505 = vpop.f32.mrb[0].mxu0
        %v1506 = vadd.f32 %v838, %v1505
        %v1507 = vpop.f32.mrb[0].mxu0
        %1508 = vdwg.mxu0
        %1509 = vmatprep.subr.bf16.mxu0 0
        %1510 = vmatpush1.bf16.msra.mxu0 %v1212
        %1511 = vmatprep.subr.bf16.mxu0 0
        %1512 = vmatpush1.bf16.msra.mxu0 %v1215
        %1513 = vmatprep.subr.bf16.mxu0 0
        %1514 = vmatpush1.bf16.msra.mxu0 %v1218
        %1515 = vmatprep.subr.bf16.mxu0 0
        %1516 = vmatpush1.bf16.msra.mxu0 %v1221
        %1517 = vmatprep.subr.bf16.mxu0 0
        %1518 = vmatpush1.bf16.msra.mxu0 %v1224
        %1519 = vmatprep.subr.bf16.mxu0 0
        %1520 = vmatpush1.bf16.msra.mxu0 %v1227
        %1521 = vmatprep.subr.bf16.mxu0 0
        %1522 = vmatpush1.bf16.msra.mxu0 %v1230
        %1523 = vmatprep.subr.bf16.mxu0 0
        %1524 = vmatpush1.bf16.msra.mxu0 %v1233
        %1525 = vmatprep.subr.bf16.mxu0 0
        %1526 = vmatpush1.bf16.msra.mxu0 %v1236
        %1527 = vmatprep.subr.bf16.mxu0 0
        %1528 = vmatpush1.bf16.msra.mxu0 %v1239
        %1529 = vmatprep.subr.bf16.mxu0 0
        %1530 = vmatpush1.bf16.msra.mxu0 %v1242
        %1531 = vmatprep.subr.bf16.mxu0 0
        %1532 = vmatpush1.bf16.msra.mxu0 %v1245
        %1533 = vmatprep.subr.bf16.mxu0 0
        %1534 = vmatpush1.bf16.msra.mxu0 %v1248
        %1535 = vmatprep.subr.bf16.mxu0 0
        %1536 = vmatpush1.bf16.msra.mxu0 %v1251
        %1537 = vmatprep.subr.bf16.mxu0 0
        %1538 = vmatpush1.bf16.msra.mxu0 %v1254
        %1539 = vmatprep.subr.bf16.mxu0 0
        %1540 = vmatpush1.bf16.msra.mxu0 %v1257
        %1541 = vmatprep.mubr.bf16.mxu0 %v693
        %1542 = vmatmul.mubr.bf16.gmra.mrb[0].mxu0 %v692
        %v1543 = vpop.f32.mrb[0].mxu0
        %v1544 = vadd.f32 %v1495, %v1543
        %v1545 = vpop.f32.mrb[0].mxu0
        %v1546 = vpop.f32.mrb[0].mxu0
        %v1547 = vadd.f32 %v1498, %v1546
        %v1548 = vpop.f32.mrb[0].mxu0
        %1549 = vmatprep.mubr.bf16.mxu0 %v697
        %1550 = vmatmul.mubr.bf16.gmra.mrb[0].mxu0 %v696
        %v1551 = vpop.f32.mrb[0].mxu0
        %v1552 = vadd.f32 %v1503, %v1551
        %v1553 = vpop.f32.mrb[0].mxu0
        %v1554 = vpop.f32.mrb[0].mxu0
        %v1555 = vadd.f32 %v1506, %v1554
        %v1556 = vpop.f32.mrb[0].mxu0
        %1557 = vdwg.mxu0
        %vm1558 = vcmp.lt.s32.totalorder %v467, 300
        %vm1559 = vcmp.lt.s32.totalorder %v468, 300
        %vm1560 = vcmp.lt.s32.totalorder %v469, 300
        %v1561 = vadd.f32 %v1442, %v1444
        %v1562 = vadd.f32 %v1561, %v1544
        %1563 = vadd.xlane.f32.xlu0 %v1562
        %v1564 = vpop.xlane.xlu0 %1563
        %v1565 = vadd.f32 %v1446, %v1448
        %v1566 = vadd.f32 %v1565, %v1547
        %1567 = vadd.xlane.f32.xlu0 %v1566
        %v1568 = vpop.xlane.xlu0 %1567
        %v1569 = vadd.f32 %v1452, %v1454
        %v1570 = vadd.f32 %v1569, %v1552
        %1571 = vadd.xlane.f32.xlu0 %v1570
        %v1572 = vpop.xlane.xlu0 %1571
        %v1573 = vadd.f32 %v1456, %v1458
        %v1574 = vadd.f32 %v1573, %v1555
        %1575 = vadd.xlane.f32.xlu0 %v1574
        %v1576 = vpop.xlane.xlu0 %1575
        %v1577 = vmul.f32 %v1564, 0.0033333334
        %v1578 = vmul.f32 %v1568, 0.0033333334
        %v1579 = vmul.f32 %v1572, 0.0033333334
        %v1580 = vmul.f32 %v1576, 0.0033333334
        %v1581 = vsub.f32 %v1442, %v1577
        %v1582 = vsub.f32 %v1444, %v1577
        %v1583 = vsub.f32 %v1544, %v1577
        %v1584 = vsub.f32 %v1446, %v1578
        %v1585 = vsub.f32 %v1448, %v1578
        %v1586 = vsub.f32 %v1547, %v1578
        %v1587 = vsub.f32 %v1452, %v1579
        %v1588 = vsub.f32 %v1454, %v1579
        %v1589 = vsub.f32 %v1552, %v1579
        %v1590 = vsub.f32 %v1456, %v1580
        %v1591 = vsub.f32 %v1458, %v1580
        %v1592 = vsub.f32 %v1555, %v1580
        %v1593 = vsel %vm1558, %v1581, 0.0
        %v1594 = vsel %vm1559, %v1582, 0.0
        %v1595 = vsel %vm1560, %v1583, 0.0
        %v1596 = vsel %vm1558, %v1584, 0.0
        %v1597 = vsel %vm1559, %v1585, 0.0
        %v1598 = vsel %vm1560, %v1586, 0.0
        %v1599 = vsel %vm1558, %v1587, 0.0
        %v1600 = vsel %vm1559, %v1588, 0.0
        %v1601 = vsel %vm1560, %v1589, 0.0
        %v1602 = vsel %vm1558, %v1590, 0.0
        %v1603 = vsel %vm1559, %v1591, 0.0
        %v1604 = vsel %vm1560, %v1592, 0.0
        %v1605 = vmul.f32 %v1593, %v1593
        %v1606 = vmul.f32 %v1594, %v1594
        %v1607 = vmul.f32 %v1595, %v1595
        %v1608 = vmul.f32 %v1596, %v1596
        %v1609 = vmul.f32 %v1597, %v1597
        %v1610 = vmul.f32 %v1598, %v1598
        %v1611 = vmul.f32 %v1599, %v1599
        %v1612 = vmul.f32 %v1600, %v1600
        %v1613 = vmul.f32 %v1601, %v1601
        %v1614 = vmul.f32 %v1602, %v1602
        %v1615 = vmul.f32 %v1603, %v1603
        %v1616 = vmul.f32 %v1604, %v1604
        %v1617 = vadd.f32 %v1605, %v1606
        %v1618 = vadd.f32 %v1617, %v1607
        %1619 = vadd.xlane.f32.xlu0 %v1618
        %v1620 = vpop.xlane.xlu0 %1619
        %v1621 = vadd.f32 %v1608, %v1609
        %v1622 = vadd.f32 %v1621, %v1610
        %1623 = vadd.xlane.f32.xlu0 %v1622
        %v1624 = vpop.xlane.xlu0 %1623
        %v1625 = vadd.f32 %v1611, %v1612
        %v1626 = vadd.f32 %v1625, %v1613
        %1627 = vadd.xlane.f32.xlu0 %v1626
        %v1628 = vpop.xlane.xlu0 %1627
        %v1629 = vadd.f32 %v1614, %v1615
        %v1630 = vadd.f32 %v1629, %v1616
        %1631 = vadd.xlane.f32.xlu0 %v1630
        %v1632 = vpop.xlane.xlu0 %1631
        %v1633 = vmul.f32 %v1620, 0.0033333334
        %v1634 = vmul.f32 %v1624, 0.0033333334
        %v1635 = vmul.f32 %v1628, 0.0033333334
        %v1636 = vmul.f32 %v1632, 0.0033333334
        %v1637 = vadd.f32 %v1633, 1e-05
        %v1638 = vadd.f32 %v1634, 1e-05
        %v1639 = vadd.f32 %v1635, 1e-05
        %v1640 = vadd.f32 %v1636, 1e-05
        %v1641 = vrsqrt.pop %v1637
        %v1642 = vrsqrt.pop %v1638
        %v1643 = vrsqrt.pop %v1639
        %v1644 = vrsqrt.pop %v1640
        %v1645 = vmul.f32 %v1593, %v1641
        %v1646 = vmul.f32 %v1594, %v1641
        %v1647 = vmul.f32 %v1595, %v1641
        %v1648 = vmul.f32 %v1596, %v1642
        %v1649 = vmul.f32 %v1597, %v1642
        %v1650 = vmul.f32 %v1598, %v1642
        %v1651 = vmul.f32 %v1599, %v1643
        %v1652 = vmul.f32 %v1600, %v1643
        %v1653 = vmul.f32 %v1601, %v1643
        %v1654 = vmul.f32 %v1602, %v1644
        %v1655 = vmul.f32 %v1603, %v1644
        %v1656 = vmul.f32 %v1604, %v1644
        %v1658 = vlaneseq
        %v1659 = vshrl.u32 %v1658, 7
        %v1660 = vsub.s32 0, %v1659
        %v1661 = vrot.slane %v687, %v1660
        %v1662 = vlaneseq
        %v1663 = vshrl.u32 %v1662, 7
        %v1664 = vsub.s32 1, %v1663
        %v1665 = vrot.slane %v687, %v1664
        %v1666 = vlaneseq
        %v1667 = vshrl.u32 %v1666, 7
        %v1668 = vsub.s32 2, %v1667
        %v1669 = vrot.slane %v687, %v1668
        %v1673 = vmul.f32 %v1645, %v1661
        %v1674 = vmul.f32 %v1646, %v1665
        %v1675 = vmul.f32 %v1647, %v1669
        %v1676 = vmul.f32 %v1648, %v1661
        %v1677 = vmul.f32 %v1649, %v1665
        %v1678 = vmul.f32 %v1650, %v1669
        %v1679 = vmul.f32 %v1651, %v1661
        %v1680 = vmul.f32 %v1652, %v1665
        %v1681 = vmul.f32 %v1653, %v1669
        %v1682 = vmul.f32 %v1654, %v1661
        %v1683 = vmul.f32 %v1655, %v1665
        %v1684 = vmul.f32 %v1656, %v1669
        %v1686 = vlaneseq
        %v1687 = vshrl.u32 %v1686, 7
        %v1688 = vsub.s32 0, %v1687
        %v1689 = vrot.slane %v689, %v1688
        %v1690 = vlaneseq
        %v1691 = vshrl.u32 %v1690, 7
        %v1692 = vsub.s32 1, %v1691
        %v1693 = vrot.slane %v689, %v1692
        %v1694 = vlaneseq
        %v1695 = vshrl.u32 %v1694, 7
        %v1696 = vsub.s32 2, %v1695
        %v1697 = vrot.slane %v689, %v1696
        %v1701 = vadd.f32 %v1673, %v1689
        %v1702 = vadd.f32 %v1674, %v1693
        %v1703 = vadd.f32 %v1675, %v1697
        %v1704 = vadd.f32 %v1676, %v1689
        %v1705 = vadd.f32 %v1677, %v1693
        %v1706 = vadd.f32 %v1678, %v1697
        %v1707 = vadd.f32 %v1679, %v1689
        %v1708 = vadd.f32 %v1680, %v1693
        %v1709 = vadd.f32 %v1681, %v1697
        %v1710 = vadd.f32 %v1682, %v1689
        %v1711 = vadd.f32 %v1683, %v1693
        %v1712 = vadd.f32 %v1684, %v1697
        %s1713 = scalar_lea.vmem %s5, 3
        %v1714 = vld [vmem:[%s1713] ss:$8 sm:$0x7]
        %s1715 = scalar_lea.vmem %s5, 4
        %v1716 = vld [vmem:[%s1715] ss:$8 sm:$0x7]
        %1718 = vset.pattern.permute.xlu0 0
        %1719 = vperm.xlu0 %1718, %v297
        %v1720 = vpop.permute.xlu0 %1719
        %1723 = vset.pattern.permute.xlu0 0
        %1724 = vperm.xlu0 %1723, %v298
        %v1725 = vpop.permute.xlu0 %1724
        %1728 = vset.pattern.permute.xlu0 0
        %1729 = vperm.xlu0 %1728, %v299
        %v1730 = vpop.permute.xlu0 %1729
        %1733 = vset.pattern.permute.xlu0 0
        %1734 = vperm.xlu0 %1733, %v300
        %v1735 = vpop.permute.xlu0 %1734
        %v1738 = vlaneseq
        %v1739 = vshrl.u32 %v1738, 7
        %v1740 = vsub.s32 0, %v1739
        %v1741 = vrot.slane %v1716, %v1740
        %v1742 = vlaneseq
        %v1743 = vshrl.u32 %v1742, 7
        %v1744 = vsub.s32 1, %v1743
        %v1745 = vrot.slane %v1716, %v1744
        %v1746 = vlaneseq
        %v1747 = vshrl.u32 %v1746, 7
        %v1748 = vsub.s32 2, %v1747
        %v1749 = vrot.slane %v1716, %v1748
        %v1753 = vmul.f32 %v1720, %v1741
        %v1754 = vmul.f32 %v1720, %v1745
        %v1755 = vmul.f32 %v1720, %v1749
        %v1756 = vmul.f32 %v1725, %v1741
        %v1757 = vmul.f32 %v1725, %v1745
        %v1758 = vmul.f32 %v1725, %v1749
        %v1759 = vmul.f32 %v1730, %v1741
        %v1760 = vmul.f32 %v1730, %v1745
        %v1761 = vmul.f32 %v1730, %v1749
        %v1762 = vmul.f32 %v1735, %v1741
        %v1763 = vmul.f32 %v1735, %v1745
        %v1764 = vmul.f32 %v1735, %v1749
        %v1766 = vlaneseq
        %v1767 = vshrl.u32 %v1766, 7
        %v1768 = vsub.s32 0, %v1767
        %v1769 = vrot.slane %v1714, %v1768
        %v1770 = vlaneseq
        %v1771 = vshrl.u32 %v1770, 7
        %v1772 = vsub.s32 1, %v1771
        %v1773 = vrot.slane %v1714, %v1772
        %v1774 = vlaneseq
        %v1775 = vshrl.u32 %v1774, 7
        %v1776 = vsub.s32 2, %v1775
        %v1777 = vrot.slane %v1714, %v1776
        %v1781 = vadd.f32 %v1769, %v1753
        %v1782 = vadd.f32 %v1773, %v1754
        %v1783 = vadd.f32 %v1777, %v1755
        %v1784 = vadd.f32 %v1769, %v1756
        %v1785 = vadd.f32 %v1773, %v1757
        %v1786 = vadd.f32 %v1777, %v1758
        %v1787 = vadd.f32 %v1769, %v1759
        %v1788 = vadd.f32 %v1773, %v1760
        %v1789 = vadd.f32 %v1777, %v1761
        %v1790 = vadd.f32 %v1769, %v1762
        %v1791 = vadd.f32 %v1773, %v1763
        %v1792 = vadd.f32 %v1777, %v1764
        %s1793 = scalar_lea.vmem %s5, 5
        %v1794 = vld [vmem:[%s1793] ss:$8 sm:$0x7]
        %1795 = vset.pattern.permute.xlu0 1
        %1796 = vperm.xlu0 %1795, %v297
        %v1797 = vpop.permute.xlu0 %1796
        %1799 = vset.pattern.permute.xlu0 1
        %1800 = vperm.xlu0 %1799, %v298
        %v1801 = vpop.permute.xlu0 %1800
        %1803 = vset.pattern.permute.xlu0 1
        %1804 = vperm.xlu0 %1803, %v299
        %v1805 = vpop.permute.xlu0 %1804
        %1807 = vset.pattern.permute.xlu0 1
        %1808 = vperm.xlu0 %1807, %v300
        %v1809 = vpop.permute.xlu0 %1808
        %v1812 = vlaneseq
        %v1813 = vshrl.u32 %v1812, 7
        %v1814 = vsub.s32 0, %v1813
        %v1815 = vrot.slane %v1794, %v1814
        %v1816 = vlaneseq
        %v1817 = vshrl.u32 %v1816, 7
        %v1818 = vsub.s32 1, %v1817
        %v1819 = vrot.slane %v1794, %v1818
        %v1820 = vlaneseq
        %v1821 = vshrl.u32 %v1820, 7
        %v1822 = vsub.s32 2, %v1821
        %v1823 = vrot.slane %v1794, %v1822
        %v1827 = vmul.f32 %v1797, %v1815
        %v1828 = vmul.f32 %v1797, %v1819
        %v1829 = vmul.f32 %v1797, %v1823
        %v1830 = vmul.f32 %v1801, %v1815
        %v1831 = vmul.f32 %v1801, %v1819
        %v1832 = vmul.f32 %v1801, %v1823
        %v1833 = vmul.f32 %v1805, %v1815
        %v1834 = vmul.f32 %v1805, %v1819
        %v1835 = vmul.f32 %v1805, %v1823
        %v1836 = vmul.f32 %v1809, %v1815
        %v1837 = vmul.f32 %v1809, %v1819
        %v1838 = vmul.f32 %v1809, %v1823
        %v1839 = vadd.f32 %v1781, %v1827
        %v1840 = vadd.f32 %v1782, %v1828
        %v1841 = vadd.f32 %v1783, %v1829
        %v1842 = vadd.f32 %v1784, %v1830
        %v1843 = vadd.f32 %v1785, %v1831
        %v1844 = vadd.f32 %v1786, %v1832
        %v1845 = vadd.f32 %v1787, %v1833
        %v1846 = vadd.f32 %v1788, %v1834
        %v1847 = vadd.f32 %v1789, %v1835
        %v1848 = vadd.f32 %v1790, %v1836
        %v1849 = vadd.f32 %v1791, %v1837
        %v1850 = vadd.f32 %v1792, %v1838
        %s1851 = scalar_lea.vmem %s5, 6
        %v1852 = vld [vmem:[%s1851] ss:$8 sm:$0x7]
        %1853 = vset.pattern.permute.xlu0 2
        %1854 = vperm.xlu0 %1853, %v297
        %v1855 = vpop.permute.xlu0 %1854
        %1857 = vset.pattern.permute.xlu0 2
        %1858 = vperm.xlu0 %1857, %v298
        %v1859 = vpop.permute.xlu0 %1858
        %1861 = vset.pattern.permute.xlu0 2
        %1862 = vperm.xlu0 %1861, %v299
        %v1863 = vpop.permute.xlu0 %1862
        %1865 = vset.pattern.permute.xlu0 2
        %1866 = vperm.xlu0 %1865, %v300
        %v1867 = vpop.permute.xlu0 %1866
        %v1870 = vlaneseq
        %v1871 = vshrl.u32 %v1870, 7
        %v1872 = vsub.s32 0, %v1871
        %v1873 = vrot.slane %v1852, %v1872
        %v1874 = vlaneseq
        %v1875 = vshrl.u32 %v1874, 7
        %v1876 = vsub.s32 1, %v1875
        %v1877 = vrot.slane %v1852, %v1876
        %v1878 = vlaneseq
        %v1879 = vshrl.u32 %v1878, 7
        %v1880 = vsub.s32 2, %v1879
        %v1881 = vrot.slane %v1852, %v1880
        %v1885 = vmul.f32 %v1855, %v1873
        %v1886 = vmul.f32 %v1855, %v1877
        %v1887 = vmul.f32 %v1855, %v1881
        %v1888 = vmul.f32 %v1859, %v1873
        %v1889 = vmul.f32 %v1859, %v1877
        %v1890 = vmul.f32 %v1859, %v1881
        %v1891 = vmul.f32 %v1863, %v1873
        %v1892 = vmul.f32 %v1863, %v1877
        %v1893 = vmul.f32 %v1863, %v1881
        %v1894 = vmul.f32 %v1867, %v1873
        %v1895 = vmul.f32 %v1867, %v1877
        %v1896 = vmul.f32 %v1867, %v1881
        %v1897 = vadd.f32 %v1839, %v1885
        %v1898 = vadd.f32 %v1840, %v1886
        %v1899 = vadd.f32 %v1841, %v1887
        %v1900 = vadd.f32 %v1842, %v1888
        %v1901 = vadd.f32 %v1843, %v1889
        %v1902 = vadd.f32 %v1844, %v1890
        %v1903 = vadd.f32 %v1845, %v1891
        %v1904 = vadd.f32 %v1846, %v1892
        %v1905 = vadd.f32 %v1847, %v1893
        %v1906 = vadd.f32 %v1848, %v1894
        %v1907 = vadd.f32 %v1849, %v1895
        %v1908 = vadd.f32 %v1850, %v1896
        %s1909 = scalar_lea.vmem %s5, 7
        %v1910 = vld [vmem:[%s1909] ss:$8 sm:$0x7]
        %1911 = vset.pattern.permute.xlu0 3
        %1912 = vperm.xlu0 %1911, %v297
        %v1913 = vpop.permute.xlu0 %1912
        %1915 = vset.pattern.permute.xlu0 3
        %1916 = vperm.xlu0 %1915, %v298
        %v1917 = vpop.permute.xlu0 %1916
        %1919 = vset.pattern.permute.xlu0 3
        %1920 = vperm.xlu0 %1919, %v299
        %v1921 = vpop.permute.xlu0 %1920
        %1923 = vset.pattern.permute.xlu0 3
        %1924 = vperm.xlu0 %1923, %v300
        %v1925 = vpop.permute.xlu0 %1924
        %v1928 = vlaneseq
        %v1929 = vshrl.u32 %v1928, 7
        %v1930 = vsub.s32 0, %v1929
        %v1931 = vrot.slane %v1910, %v1930
        %v1932 = vlaneseq
        %v1933 = vshrl.u32 %v1932, 7
        %v1934 = vsub.s32 1, %v1933
        %v1935 = vrot.slane %v1910, %v1934
        %v1936 = vlaneseq
        %v1937 = vshrl.u32 %v1936, 7
        %v1938 = vsub.s32 2, %v1937
        %v1939 = vrot.slane %v1910, %v1938
        %v1943 = vmul.f32 %v1913, %v1931
        %v1944 = vmul.f32 %v1913, %v1935
        %v1945 = vmul.f32 %v1913, %v1939
        %v1946 = vmul.f32 %v1917, %v1931
        %v1947 = vmul.f32 %v1917, %v1935
        %v1948 = vmul.f32 %v1917, %v1939
        %v1949 = vmul.f32 %v1921, %v1931
        %v1950 = vmul.f32 %v1921, %v1935
        %v1951 = vmul.f32 %v1921, %v1939
        %v1952 = vmul.f32 %v1925, %v1931
        %v1953 = vmul.f32 %v1925, %v1935
        %v1954 = vmul.f32 %v1925, %v1939
        %v1955 = vadd.f32 %v1897, %v1943
        %v1956 = vadd.f32 %v1898, %v1944
        %v1957 = vadd.f32 %v1899, %v1945
        %v1958 = vadd.f32 %v1900, %v1946
        %v1959 = vadd.f32 %v1901, %v1947
        %v1960 = vadd.f32 %v1902, %v1948
        %v1961 = vadd.f32 %v1903, %v1949
        %v1962 = vadd.f32 %v1904, %v1950
        %v1963 = vadd.f32 %v1905, %v1951
        %v1964 = vadd.f32 %v1906, %v1952
        %v1965 = vadd.f32 %v1907, %v1953
        %v1966 = vadd.f32 %v1908, %v1954
        %v1967 = vadd.f32 %v1701, %v1955
        %v1968 = vadd.f32 %v1702, %v1956
        %v1969 = vadd.f32 %v1703, %v1957
        %v1970 = vadd.f32 %v1704, %v1958
        %v1971 = vadd.f32 %v1705, %v1959
        %v1972 = vadd.f32 %v1706, %v1960
        %v1973 = vadd.f32 %v1707, %v1961
        %v1974 = vadd.f32 %v1708, %v1962
        %v1975 = vadd.f32 %v1709, %v1963
        %v1976 = vadd.f32 %v1710, %v1964
        %v1977 = vadd.f32 %v1711, %v1965
        %v1978 = vadd.f32 %v1712, %v1966
        %v1979 = vmax.f32 %v1967, 0.0
        %v1980 = vmax.f32 %v1968, 0.0
        %v1981 = vmax.f32 %v1969, 0.0
        %v1982 = vmax.f32 %v1970, 0.0
        %v1983 = vmax.f32 %v1971, 0.0
        %v1984 = vmax.f32 %v1972, 0.0
        %v1985 = vmax.f32 %v1973, 0.0
        %v1986 = vmax.f32 %v1974, 0.0
        %v1987 = vmax.f32 %v1975, 0.0
        %v1988 = vmax.f32 %v1976, 0.0
        %v1989 = vmax.f32 %v1977, 0.0
        %v1990 = vmax.f32 %v1978, 0.0
        %s1991 = scalar_lea.vmem %s5, 24
        %v1992 = vld [vmem:[%s1991] ss:$8 sm:$0x7]
        %v1993 = vld [vmem:[%s5 + $0x19] ss:$0 sm:$0xff]
        %v1995 = vlaneseq
        %v1996 = vshrl.u32 %v1995, 7
        %v1997 = vsub.s32 0, %v1996
        %v1998 = vrot.slane %v1992, %v1997
        %v1999 = vlaneseq
        %v2000 = vshrl.u32 %v1999, 7
        %v2001 = vsub.s32 1, %v2000
        %v2002 = vrot.slane %v1992, %v2001
        %v2003 = vlaneseq
        %v2004 = vshrl.u32 %v2003, 7
        %v2005 = vsub.s32 2, %v2004
        %v2006 = vrot.slane %v1992, %v2005
        %v2010 = vmul.f32 %v1979, %v1998
        %v2011 = vmul.f32 %v1980, %v2002
        %v2012 = vmul.f32 %v1981, %v2006
        %v2013 = vmul.f32 %v1982, %v1998
        %v2014 = vmul.f32 %v1983, %v2002
        %v2015 = vmul.f32 %v1984, %v2006
        %v2016 = vmul.f32 %v1985, %v1998
        %v2017 = vmul.f32 %v1986, %v2002
        %v2018 = vmul.f32 %v1987, %v2006
        %v2019 = vmul.f32 %v1988, %v1998
        %v2020 = vmul.f32 %v1989, %v2002
        %v2021 = vmul.f32 %v1990, %v2006
        %v2022 = vadd.f32 %v2010, %v2011
        %v2023 = vadd.f32 %v2022, %v2012
        %2024 = vadd.xlane.f32.xlu0 %v2023
        %v2025 = vpop.xlane.xlu0 %2024
        %v2026 = vadd.f32 %v2013, %v2014
        %v2027 = vadd.f32 %v2026, %v2015
        %2028 = vadd.xlane.f32.xlu0 %v2027
        %v2029 = vpop.xlane.xlu0 %2028
        %v2030 = vadd.f32 %v2016, %v2017
        %v2031 = vadd.f32 %v2030, %v2018
        %2032 = vadd.xlane.f32.xlu0 %v2031
        %v2033 = vpop.xlane.xlu0 %2032
        %v2034 = vadd.f32 %v2019, %v2020
        %v2035 = vadd.f32 %v2034, %v2021
        %2036 = vadd.xlane.f32.xlu0 %v2035
        %v2037 = vpop.xlane.xlu0 %2036
        %v2038 = vadd.f32 %v2025, %v1993
        %v2039 = vadd.f32 %v2029, %v1993
        %v2040 = vadd.f32 %v2033, %v1993
        %v2041 = vadd.f32 %v2037, %v1993
        %vm2042 = vcmask 7168
        %2043 = vst.msk [vmem:[%s290] sm:$0xff] %vm2042, %v2038
        %2044 = vst.msk [vmem:[%s290 + $0x8] sm:$0xff] %vm2042, %v2039
        %2045 = vst.msk [vmem:[%s290 + $0x10] sm:$0xff] %vm2042, %v2040
        %2046 = vst.msk [vmem:[%s290 + $0x18] sm:$0xff] %vm2042, %v2041
        %s2047 = smul.u32 4, %s18
        %p2048 = scmp.lt.s32.totalorder %s2047, 7
        %s2049 = scalar_select %p2048, %s2047, 7
        %s2050 = smul.addr %s2049, 8
        %s2051 = scalar_lea.vmem %s6, %s2050
        // Predicated region
        $region49: #{critic_forward.1} parent=43 // pred_check
          %p2052 = pneg %p172
        $region50: #{critic_forward.1} parent=43 // pred_check_branch
          %2054 = sbr.rel (%p2052) target = $region52
        $region51: #{critic_forward.1} parent=43 // pred_region
          %s2055 = smul.u32 4, %s18
        $region52: #{critic_forward.1} parent=43 // pred_fallthru
          _
      $region44: #{critic_forward.1} parent=5 // pred_fallthru
        _
      %p2056 = scmp.le.s32.totalorder 2, %s13
      // Predicated region
      $region53: #{critic_forward.1} parent=5 // pred_check
        %p2057 = pneg %p2056
      $region54: #{critic_forward.1} parent=5 // pred_check_branch
        %2059 = sbr.rel (%p2057) target = $region56
      $region55: #{critic_forward.1} parent=5 // pred_region
        %s2060 = ssub.s32 %s13, 2
        // Predicated region
        $region57: #{critic_forward.1} parent=55 // pred_check
          %p2061 = pneg %p178
        $region58: #{critic_forward.1} parent=55 // pred_check_branch
          %2063 = sbr.rel (%p2061) target = $region60
        $region59: #{critic_forward.1} parent=55 // pred_region
          %s2064 = smul.u32 4, %s19
          %p2065 = scmp.lt.s32.totalorder %s2064, 7
          %s2066 = scalar_select %p2065, %s2064, 7
          %s2067 = smul.addr %s2066, 8
          %s2068 = scalar_lea.vmem %s6, %s2067
        $region60: #{critic_forward.1} parent=55 // pred_fallthru
          _
      $region56: #{critic_forward.1} parent=5 // pred_fallthru
        _
    $region6: #{critic_forward.1} parent=1 // loop_footer
      %s17 = sadd.s32 1, %s13
    $region7: #{critic_forward.1} parent=1 // loop_footer_branch
      %12 = sbr.rel target = $region3
    $region8: #{critic_forward.1} parent=1 // loop_exit
      _
    %2069 = vsyncpa [#allocation3], 1
    %s2070 = scalar_lea.sflag [#allocation3], 1
    %2071 = vsyncpa %s2070, 1

</llo_original>
